<compile_context>
chip_gen: v7x
topology: tpu7x:2x2x1
jax: 0.10.0
libtpu: 0.0.40
codegen_flags: <defaults>
</compile_context>

<pallas_src>
import functools

import jax
import jax.numpy as jnp
from jax.experimental import pallas as pl
from jax.experimental.pallas import tpu as pltpu

_NEG_LARGE = -1e30   # finite "-inf": padded-only tiles never produce NaN/Inf


# ---------------------------------------------------------------------------
# Kernel
# ---------------------------------------------------------------------------
def clam_mb_kernel(h_ref, w1_ref, b1_ref, w_ab_ref, b_ab_ref, wc_t_ref, bc_ref,
                   m_out, l_out, macc_out, att_ref,
                   m_scr, l_scr, macc_scr,
                   *, n_valid, tile_n, tiles_per_shard, attn_d):
    s = pl.program_id(0)      # parallel shard axis (feeds v7x's second TensorCore)
    t = pl.program_id(1)      # reduction over instance tiles within a shard

    @pl.when(t == 0)
    def _init():
        m_scr[...] = jnp.full_like(m_scr, _NEG_LARGE)
        l_scr[...] = jnp.zeros_like(l_scr)
        macc_scr[...] = jnp.zeros_like(macc_scr)

    # Column-validity mask for padded instance rows (h itself is zero-padded
    # in the wrapper, so padded rows are finite; only the softmax mask is needed).
    row0 = (s * tiles_per_shard + t) * tile_n
    col_ids = jax.lax.broadcasted_iota(jnp.int32, (1, tile_n), 1) + row0   # (1, T)
    col_valid = col_ids < n_valid

    # ---- fc + ReLU: bf16 MXU, f32 accumulate, cast once; h1 lives only in bf16
    h1f = jnp.dot(h_ref[...], w1_ref[...],
                  preferred_element_type=jnp.float32) + b1_ref[...]        # (T, H) f32
    h1c = jnp.maximum(h1f, 0.0).astype(h_ref.dtype)                        # (T, H) bf16

    # ---- gated attention net: single fused [Wa | Wb] matmul, split the halves
    ab = jnp.dot(h1c, w_ab_ref[...],
                 preferred_element_type=jnp.float32) + b_ab_ref[...]       # (T, 2D)
    g = jnp.tanh(ab[:, :attn_d]) * jax.nn.sigmoid(ab[:, attn_d:])          # (T, D) f32

    # ---- lane-dense attention scores: (C, T) = Wc @ g^T + bc
    att = jax.lax.dot_general(
        wc_t_ref[...], g, dimension_numbers=(((1,), (1,)), ((), ())),
        preferred_element_type=jnp.float32) + bc_ref[...]
    att_ref[...] = jnp.where(col_valid, att, 0.0)        # raw scores streamed out

    # ---- online softmax over instances + unnormalized bag accumulation
    att_m = jnp.where(col_valid, att, _NEG_LARGE)                          # (C, T)
    m_old = m_scr[...]                                                     # (C, 1)
    m_new = jnp.maximum(m_old, jnp.max(att_m, axis=1, keepdims=True))
    alpha = jnp.exp(m_old - m_new)                                         # (C, 1)
    p = jnp.exp(att_m - m_new)                                             # (C, T), 0 at padding
    l_scr[...] = alpha * l_scr[...] + jnp.sum(p, axis=1, keepdims=True)
    macc_scr[...] = alpha * macc_scr[...] + jnp.dot(
        p.astype(h1c.dtype), h1c, preferred_element_type=jnp.float32)      # bf16 MXU, f32 acc
    m_scr[...] = m_new

    # ---- emit per-shard flash partials; merged (tiny, O(C*H)) in the wrapper
    @pl.when(t == tiles_per_shard - 1)
    def _emit():
        m_out[0] = m_scr[...]
        l_out[0] = l_scr[...]
        macc_out[0] = macc_scr[...]


# ---------------------------------------------------------------------------
# Wrapper
# ---------------------------------------------------------------------------
def _device_kind():
    try:
        return jax.devices()[0].device_kind.lower()
    except Exception:
        return ""


def _pick_vmem_limit():
    """Per-generation VMEM request: headroom on v7x (64 MiB physical),
    most of the 128 MiB on v5e/v6e."""
    try:
        cap = int(pltpu.get_tpu_info().vmem_capacity_bytes)
    except Exception:
        cap = 64 << 20                       # conservative (v7x-sized) fallback
    return max(32 << 20, min(cap - (16 << 20), 100 << 20))


def _choose_tile_n(n, e, h_dim, d, c, bytes_in, vmem_limit, kind):
    # Weights: counted double-buffered (the default pipeline allocates two
    # buffers even for constant index_maps).
    weight_bytes = 2 * ((e * h_dim + 2 * h_dim * d) * bytes_in
                        + (h_dim + 2 * d + c * d + c) * 4)
    # Per instance row: double-buffered bf16 h tile + concurrently live
    # intermediates (h1 f32 pre-cast + h1c bf16 + ab f32 + g f32) + tiny (C,*).
    per_row = 2 * e * bytes_in + 6 * h_dim + 12 * d + 8 * c
    scratch_bytes = 3 * 4 * c * (h_dim + 2)
    budget = int(vmem_limit * 0.75) - weight_bytes - scratch_bytes
    # v5e: 0.35 us/step is already <5% at 1-2k rows; bigger tiles only inflate
    # f32 intermediates / store traffic.  v6e/v7x: go larger.
    cap = 2048 if "v5" in kind else 4096
    tile = (budget // per_row) // 128 * 128
    tile = max(256, min(cap, tile))
    n_pad = ((n + 127) // 128) * 128
    return int(min(tile, n_pad))


def clam_mb_forward(h, params, *, tile_n=None, use_bf16=True):
    """Fused CLAM_MB forward. Returns (logits, Y_prob, results_dict, A[1])."""
    N, E = h.shape
    H = params["w1"].shape[1]
    D = params["wa"].shape[1]
    C = params["wc_t"].shape[0]

    cdt = jnp.bfloat16 if use_bf16 else jnp.float32
    w1 = params["w1"].astype(cdt)
    w_ab = jnp.concatenate([params["wa"], params["wb"]], axis=1).astype(cdt)  # (H, 2D)
    b1 = params["b1"]
    b_ab = jnp.concatenate([params["ba"], params["bb"]], axis=1)              # (1, 2D)
    wc_t, bc = params["wc_t"], params["bc"]                                   # f32 (tiny)

    kind = _device_kind()
    vmem_limit = _pick_vmem_limit()
    if tile_n is None:
        tile_n = _choose_tile_n(N, E, H, D, C, jnp.dtype(cdt).itemsize,
                                vmem_limit, kind)
    tile_n = -(-int(tile_n) // 128) * 128
    n_pad = ((N + 127) // 128) * 128
    tile_n = int(min(tile_n, n_pad))

    n_tiles = -(-N // tile_n)
    # Two shards feed both TensorCores on v7x via the "parallel" axis; on
    # single-core chips the shard axis runs serially with the same total work.
    num_shards = 2 if n_tiles >= 2 else 1
    tiles_per_shard = -(-n_tiles // num_shards)
    n_total = num_shards * tiles_per_shard * tile_n

    # Zero-pad once so padded rows are finite (no per-tile row mask in-kernel).
    h_in = jnp.pad(h.astype(cdt), ((0, n_total - N), (0, 0)))

    kernel = functools.partial(clam_mb_kernel, n_valid=N, tile_n=tile_n,
                               tiles_per_shard=tiles_per_shard, attn_d=D)

    grid_spec = pltpu.PrefetchScalarGridSpec(
        num_scalar_prefetch=0,
        grid=(num_shards, tiles_per_shard),
        in_specs=[
            pl.BlockSpec((tile_n, E), lambda s, t: (s * tiles_per_shard + t, 0)),
            pl.BlockSpec((E, H), lambda s, t: (0, 0)),        # w1   (VMEM-resident)
            pl.BlockSpec((1, H), lambda s, t: (0, 0)),        # b1
            pl.BlockSpec((H, 2 * D), lambda s, t: (0, 0)),    # [wa | wb]
            pl.BlockSpec((1, 2 * D), lambda s, t: (0, 0)),    # [ba | bb]
            pl.BlockSpec((C, D), lambda s, t: (0, 0)),        # wc^T
            pl.BlockSpec((C, 1), lambda s, t: (0, 0)),        # bc
        ],
        out_specs=[
            pl.BlockSpec((1, C, 1), lambda s, t: (s, 0, 0)),  # per-shard running max
            pl.BlockSpec((1, C, 1), lambda s, t: (s, 0, 0)),  # per-shard running sum
            pl.BlockSpec((1, C, H), lambda s, t: (s, 0, 0)),  # per-shard unnorm. bag acc
            pl.BlockSpec((C, tile_n),
                         lambda s, t: (0, s * tiles_per_shard + t)),  # raw scores
        ],
        scratch_shapes=[
            pltpu.VMEM((C, 1), jnp.float32),                  # running max
            pltpu.VMEM((C, 1), jnp.float32),                  # running sum
            pltpu.VMEM((C, H), jnp.float32),                  # unnormalized bag accumulator
        ],
    )

    out_shapes = (
        jax.ShapeDtypeStruct((num_shards, C, 1), jnp.float32),
        jax.ShapeDtypeStruct((num_shards, C, 1), jnp.float32),
        jax.ShapeDtypeStruct((num_shards, C, H), jnp.float32),
        jax.ShapeDtypeStruct((C, n_total), jnp.float32),
    )

    m_part, l_part, macc_part, att_raw = pl.pallas_call(
        kernel,
        grid_spec=grid_spec,
        out_shape=out_shapes,
        compiler_params=pltpu.CompilerParams(
            dimension_semantics=("parallel", "arbitrary"),
            vmem_limit_bytes=vmem_limit,
        ),
    )(h_in, w1, b1, w_ab, b_ab, wc_t, bc)

    # ---- tiny flash merge + bag classifier + exact A normalization (XLA) ----
    m_g = jnp.max(m_part, axis=0)                          # (C, 1)
    scale = jnp.exp(m_part - m_g)                          # (S, C, 1); 0 for padded-only shards
    l_g = jnp.sum(scale * l_part, axis=0)                  # (C, 1)
    M = jnp.sum(scale * macc_part, axis=0) / l_g           # (C, H)  exact divide
    logits = (jnp.sum(M * params["wcls"], axis=1)
              + params["bcls"][:, 0])[None, :]             # (1, C)
    y_prob = jax.nn.softmax(logits, axis=1)
    A = jnp.exp(att_raw[:, :N] - m_g) / l_g                # (C, N) exact softmax via m/l

    results_dict = {}    # default forward path (instance_eval=False)
    return logits, y_prob, results_dict, A[1]


# ---------------------------------------------------------------------------
# Params + references
# ---------------------------------------------------------------------------
def init_params(key, embed_size, hidden, attn_dim, n_classes):
    ks = jax.random.split(key, 10)
    s = 0.05
    return {
        "w1":   s * jax.random.normal(ks[0], (embed_size, hidden), jnp.float32),
        "b1":   s * jax.random.normal(ks[1], (1, hidden), jnp.float32),
        "wa":   s * jax.random.normal(ks[2], (hidden, attn_dim), jnp.float32),
        "ba":   s * jax.random.normal(ks[3], (1, attn_dim), jnp.float32),
        "wb":   s * jax.random.normal(ks[4], (hidden, attn_dim), jnp.float32),
        "bb":   s * jax.random.normal(ks[5], (1, attn_dim), jnp.float32),
        "wc_t": s * jax.random.normal(ks[6], (n_classes, attn_dim), jnp.float32),
        "bc":   s * jax.random.normal(ks[7], (n_classes, 1), jnp.float32),
        "wcls": s * jax.random.normal(ks[8], (n_classes, hidden), jnp.float32),
        "bcls": s * jax.random.normal(ks[9], (n_classes, 1), jnp.float32),
    }


def reference_forward(h, p, *, use_bf16=True):
    """Pure-JAX reference. use_bf16=True mirrors the kernel's precision policy
    (bf16 MXU inputs everywhere, f32 accumulation); use_bf16=False is pure f32."""
    cdt = jnp.bfloat16 if use_bf16 else jnp.float32
    f32 = jnp.float32
    hc = h.astype(cdt)
    h1 = jnp.maximum(jnp.dot(hc, p["w1"].astype(cdt),
                             preferred_element_type=f32) + p["b1"], 0.0)
    h1c = h1.astype(cdt)
    a = jnp.tanh(jnp.dot(h1c, p["wa"].astype(cdt), preferred_element_type=f32) + p["ba"])
    b = jax.nn.sigmoid(jnp.dot(h1c, p["wb"].astype(cdt), preferred_element_type=f32) + p["bb"])
    att = jnp.dot(a * b, p["wc_t"].T, preferred_element_type=f32) + p["bc"].T   # (N, C)
    A = jax.nn.softmax(att.T, axis=1)                                           # (C, N)
    M = jnp.dot(A.astype(cdt), h1c, preferred_element_type=f32)                 # (C, H)
    logits = (jnp.sum(M * p["wcls"], axis=1) + p["bcls"][:, 0])[None, :]        # (1, C)
    y_prob = jax.nn.softmax(logits, axis=1)
    return logits, y_prob, A[1]


# ---------------------------------------------------------------------------
# Demo / self-check
# ---------------------------------------------------------------------------
if __name__ == "__main__":
    # Small shapes consistent with the module (scaled-down 'small' config).
    # N=300, tile_n=128 -> 4 tiles over 2 shards: exercises the partial tile,
    # a fully-padded trailing tile, and the shard merge.  tile_n=None runs the
    # auto-tiled single-tile path.
    N, EMBED, HIDDEN, ATTN_D, N_CLASSES = 300, 256, 128, 128, 2

    key = jax.random.PRNGKey(0)
    k_h, k_p = jax.random.split(key)
    h = jax.random.normal(k_h, (N, EMBED), jnp.float32)
    params = init_params(k_p, EMBED, HIDDEN, ATTN_D, N_CLASSES)

    ref_logits, ref_prob, ref_a1 = reference_forward(h, params, use_bf16=True)
    f32_logits, f32_prob, f32_a1 = reference_forward(h, params, use_bf16=False)

    for tn in (128, None):
        logits, y_prob, results, a1 = clam_mb_forward(h, params, tile_n=tn, use_bf16=True)
        jax.block_until_ready((logits, y_prob, a1))

        assert logits.shape == (1, N_CLASSES) and y_prob.shape == (1, N_CLASSES)
        assert a1.shape == (N,)

        # Matched-precision check (bf16 MXU inputs, f32 accumulation in both).
        assert jnp.allclose(logits, ref_logits, atol=2e-2, rtol=2e-2), \
            f"logits mismatch: {float(jnp.max(jnp.abs(logits - ref_logits)))}"
        assert jnp.allclose(y_prob, ref_prob, atol=2e-2, rtol=2e-2), \
            f"prob mismatch: {float(jnp.max(jnp.abs(y_prob - ref_prob)))}"
        assert jnp.allclose(a1, ref_a1, atol=5e-4), \
            f"attention mismatch: {float(jnp.max(jnp.abs(a1 - ref_a1)))}"

        # Loose sanity check against the pure-f32 reference (bf16 drift bound).
        assert jnp.allclose(logits, f32_logits, atol=6e-2, rtol=6e-2)
        assert jnp.allclose(y_prob, f32_prob, atol=6e-2, rtol=6e-2)
        assert jnp.allclose(a1, f32_a1, atol=5e-2)

    print("KERNEL_OK")
</pallas_src>

<mosaic_0001>
module attributes {stable_mosaic.version = 11 : i64} {
  func.func @clam_mb_kernel(%arg0: i32, %arg1: i32, %arg2: memref<128x256xbf16, #tpu.memory_space<vmem>>, %arg3: memref<256x128xbf16, #tpu.memory_space<vmem>>, %arg4: memref<1x128xf32, #tpu.memory_space<vmem>>, %arg5: memref<128x256xbf16, #tpu.memory_space<vmem>>, %arg6: memref<1x256xf32, #tpu.memory_space<vmem>>, %arg7: memref<2x128xf32, #tpu.memory_space<vmem>>, %arg8: memref<2x1xf32, #tpu.memory_space<vmem>>, %arg9: memref<1x2x1xf32, #tpu.memory_space<vmem>>, %arg10: memref<1x2x1xf32, #tpu.memory_space<vmem>>, %arg11: memref<1x2x128xf32, #tpu.memory_space<vmem>>, %arg12: memref<2x128xf32, #tpu.memory_space<vmem>>, %arg13: memref<2x1xf32, #tpu.memory_space<vmem>>, %arg14: memref<2x1xf32, #tpu.memory_space<vmem>>, %arg15: memref<2x128xf32, #tpu.memory_space<vmem>>) attributes {dimension_semantics = [#tpu.dimension_semantics<parallel>, #tpu.dimension_semantics<arbitrary>], iteration_bounds = array<i64: 2, 2>, scalar_prefetch = 0 : i64, scratch_operands = 3 : i64, tpu.core_type = #tpu.core_type<tc>, window_params = [{transform_indices = @transform_0, window_bounds = array<i64: 128, 256>}, {pipeline_mode = #tpu.pipeline_mode<synchronous>, transform_indices = @transform_1, window_bounds = array<i64: 256, 128>}, {pipeline_mode = #tpu.pipeline_mode<synchronous>, transform_indices = @transform_2, window_bounds = array<i64: 1, 128>}, {pipeline_mode = #tpu.pipeline_mode<synchronous>, transform_indices = @transform_3, window_bounds = array<i64: 128, 256>}, {pipeline_mode = #tpu.pipeline_mode<synchronous>, transform_indices = @transform_4, window_bounds = array<i64: 1, 256>}, {pipeline_mode = #tpu.pipeline_mode<synchronous>, transform_indices = @transform_5, window_bounds = array<i64: 2, 128>}, {pipeline_mode = #tpu.pipeline_mode<synchronous>, transform_indices = @transform_6, window_bounds = array<i64: 2, 1>}, {transform_indices = @transform_7, window_bounds = array<i64: 1, 2, 1>}, {transform_indices = @transform_8, window_bounds = array<i64: 1, 2, 1>}, {transform_indices = @transform_9, window_bounds = array<i64: 1, 2, 128>}, {transform_indices = @transform_10, window_bounds = array<i64: 2, 128>}]} {
    %c0_i32 = arith.constant 0 : i32
    %0 = arith.cmpi eq, %arg1, %c0_i32 : i32
    %1 = arith.extui %0 : i1 to i32
    %c0_i32_0 = arith.constant 0 : i32
    %2 = arith.cmpi ne, %1, %c0_i32_0 : i32
    scf.if %2 {
      %cst_38 = arith.constant -1.000000e+30 : f32
      %74 = vector.broadcast %cst_38 : f32 to vector<2x1xf32>
      %c0_39 = arith.constant 0 : index
      %c0_40 = arith.constant 0 : index
      %75 = vector.load %arg13[%c0_39, %c0_40] : memref<2x1xf32, #tpu.memory_space<vmem>>, vector<2x1xf32>
      tpu.vector_store %arg13[%c0_39, %c0_40], %74 {strides = array<i32>} : memref<2x1xf32, #tpu.memory_space<vmem>>, vector<2x1xf32>,
      %cst_41 = arith.constant 0.000000e+00 : f32
      %76 = vector.broadcast %cst_41 : f32 to vector<2x1xf32>
      %c0_42 = arith.constant 0 : index
      %c0_43 = arith.constant 0 : index
      %77 = vector.load %arg14[%c0_42, %c0_43] : memref<2x1xf32, #tpu.memory_space<vmem>>, vector<2x1xf32>
      tpu.vector_store %arg14[%c0_42, %c0_43], %76 {strides = array<i32>} : memref<2x1xf32, #tpu.memory_space<vmem>>, vector<2x1xf32>,
      %cst_44 = arith.constant 0.000000e+00 : f32
      %78 = vector.broadcast %cst_44 : f32 to vector<2x128xf32>
      %c0_45 = arith.constant 0 : index
      %c0_46 = arith.constant 0 : index
      %79 = vector.load %arg15[%c0_45, %c0_46] : memref<2x128xf32, #tpu.memory_space<vmem>>, vector<2x128xf32>
      tpu.vector_store %arg15[%c0_45, %c0_46], %78 {strides = array<i32>} : memref<2x128xf32, #tpu.memory_space<vmem>>, vector<2x128xf32>,
    } else {
    }
    %c2_i32 = arith.constant 2 : i32
    %3 = arith.muli %arg0, %c2_i32 : i32
    %4 = arith.addi %3, %arg1 : i32
    %c128_i32 = arith.constant 128 : i32
    %5 = arith.muli %4, %c128_i32 : i32
    %6 = tpu.iota {dimensions = array<i32: 1>} : vector<1x128xi32>
    %7 = vector.broadcast %5 : i32 to vector<1x128xi32>
    %8 = arith.addi %6, %7 : vector<1x128xi32>
    %c300_i32 = arith.constant 300 : i32
    %9 = vector.broadcast %c300_i32 : i32 to vector<1x128xi32>
    %10 = arith.cmpi slt, %8, %9 : vector<1x128xi32>
    %c0 = arith.constant 0 : index
    %c0_1 = arith.constant 0 : index
    %11 = vector.load %arg2[%c0, %c0_1] : memref<128x256xbf16, #tpu.memory_space<vmem>>, vector<128x256xbf16>
    %c0_2 = arith.constant 0 : index
    %c0_3 = arith.constant 0 : index
    %12 = vector.load %arg3[%c0_2, %c0_3] : memref<256x128xbf16, #tpu.memory_space<vmem>>, vector<256x128xbf16>
    %cst = arith.constant dense<0.000000e+00> : vector<128x128xf32>
    %13 = tpu.matmul %11, %12, %cst {dimension_numbers = #tpu.dot_dimension_numbers<[1], [0], [0], [1], [0, 0, 1, 1], [], []>} : vector<128x256xbf16>, vector<256x128xbf16>, vector<128x128xf32> -> vector<128x128xf32>
    %c0_4 = arith.constant 0 : index
    %c0_5 = arith.constant 0 : index
    %14 = vector.load %arg4[%c0_4, %c0_5] : memref<1x128xf32, #tpu.memory_space<vmem>>, vector<1x128xf32>
    %15 = vector.broadcast %14 : vector<1x128xf32> to vector<128x128xf32>
    %16 = arith.addf %13, %15 : vector<128x128xf32>
    %cst_6 = arith.constant 0.000000e+00 : f32
    %17 = vector.broadcast %cst_6 : f32 to vector<128x128xf32>
    %18 = arith.maximumf %16, %17 : vector<128x128xf32>
    %19 = arith.truncf %18 : vector<128x128xf32> to vector<128x128xbf16>
    %c0_7 = arith.constant 0 : index
    %c0_8 = arith.constant 0 : index
    %20 = vector.load %arg5[%c0_7, %c0_8] : memref<128x256xbf16, #tpu.memory_space<vmem>>, vector<128x256xbf16>
    %cst_9 = arith.constant dense<0.000000e+00> : vector<128x256xf32>
    %21 = tpu.matmul %19, %20, %cst_9 {dimension_numbers = #tpu.dot_dimension_numbers<[1], [0], [0], [1], [0, 0, 1, 1], [], []>} : vector<128x128xbf16>, vector<128x256xbf16>, vector<128x256xf32> -> vector<128x256xf32>
    %c0_10 = arith.constant 0 : index
    %c0_11 = arith.constant 0 : index
    %22 = vector.load %arg6[%c0_10, %c0_11] : memref<1x256xf32, #tpu.memory_space<vmem>>, vector<1x256xf32>
    %23 = vector.broadcast %22 : vector<1x256xf32> to vector<128x256xf32>
    %24 = arith.addf %21, %23 : vector<128x256xf32>
    %25 = vector.extract_strided_slice %24 {offsets = [0, 0], sizes = [128, 128], strides = [1, 1]} : vector<128x256xf32> to vector<128x128xf32>
    %26 = math.tanh %25 : vector<128x128xf32>
    %27 = vector.extract_strided_slice %24 {offsets = [0, 128], sizes = [128, 128], strides = [1, 1]} : vector<128x256xf32> to vector<128x128xf32>
    %28 = arith.negf %27 : vector<128x128xf32>
    %29 = math.exp %28 : vector<128x128xf32>
    %cst_12 = arith.constant 1.000000e+00 : f32
    %30 = vector.broadcast %cst_12 : f32 to vector<128x128xf32>
    %31 = arith.addf %30, %29 : vector<128x128xf32>
    %32 = arith.divf %30, %31 : vector<128x128xf32>
    %33 = arith.mulf %26, %32 : vector<128x128xf32>
    %c0_13 = arith.constant 0 : index
    %c0_14 = arith.constant 0 : index
    %34 = vector.load %arg7[%c0_13, %c0_14] : memref<2x128xf32, #tpu.memory_space<vmem>>, vector<2x128xf32>
    %cst_15 = arith.constant dense<0.000000e+00> : vector<2x128xf32>
    %35 = tpu.matmul %34, %33, %cst_15 {dimension_numbers = #tpu.dot_dimension_numbers<[1], [1], [0], [0], [0, 0, 1, 0], [], []>} : vector<2x128xf32>, vector<128x128xf32>, vector<2x128xf32> -> vector<2x128xf32>
    %c0_16 = arith.constant 0 : index
    %c0_17 = arith.constant 0 : index
    %36 = vector.load %arg8[%c0_16, %c0_17] : memref<2x1xf32, #tpu.memory_space<vmem>>, vector<2x1xf32>
    %37 = vector.broadcast %36 : vector<2x1xf32> to vector<2x128xf32>
    %38 = arith.addf %35, %37 : vector<2x128xf32>
    %cst_18 = arith.constant 0.000000e+00 : f32
    %39 = vector.shape_cast %10 : vector<1x128xi1> to vector<1x128xi1>
    %40 = vector.broadcast %39 : vector<1x128xi1> to vector<2x128xi1>
    %41 = vector.broadcast %cst_18 : f32 to vector<2x128xf32>
    %42 = arith.select %40, %38, %41 : vector<2x128xi1>, vector<2x128xf32>
    %c0_19 = arith.constant 0 : index
    %c0_20 = arith.constant 0 : index
    %43 = vector.load %arg12[%c0_19, %c0_20] : memref<2x128xf32, #tpu.memory_space<vmem>>, vector<2x128xf32>
    tpu.vector_store %arg12[%c0_19, %c0_20], %42 {strides = array<i32>} : memref<2x128xf32, #tpu.memory_space<vmem>>, vector<2x128xf32>,
    %cst_21 = arith.constant -1.000000e+30 : f32
    %44 = vector.shape_cast %10 : vector<1x128xi1> to vector<1x128xi1>
    %45 = vector.broadcast %44 : vector<1x128xi1> to vector<2x128xi1>
    %46 = vector.broadcast %cst_21 : f32 to vector<2x128xf32>
    %47 = arith.select %45, %38, %46 : vector<2x128xi1>, vector<2x128xf32>
    %c0_22 = arith.constant 0 : index
    %c0_23 = arith.constant 0 : index
    %48 = vector.load %arg13[%c0_22, %c0_23] : memref<2x1xf32, #tpu.memory_space<vmem>>, vector<2x1xf32>
    %cst_24 = arith.constant dense<0xFF800000> : vector<2xf32>
    %49 = vector.multi_reduction <maximumf>, %47, %cst_24 [1] : vector<2x128xf32> to vector<2xf32>
    %50 = vector.shape_cast %49 : vector<2xf32> to vector<2x1xf32>
    %51 = arith.maximumf %48, %50 : vector<2x1xf32>
    %52 = arith.subf %48, %51 : vector<2x1xf32>
    %53 = math.exp %52 : vector<2x1xf32>
    %54 = vector.broadcast %51 : vector<2x1xf32> to vector<2x128xf32>
    %55 = arith.subf %47, %54 : vector<2x128xf32>
    %56 = math.exp %55 : vector<2x128xf32>
    %c0_25 = arith.constant 0 : index
    %c0_26 = arith.constant 0 : index
    %57 = vector.load %arg14[%c0_25, %c0_26] : memref<2x1xf32, #tpu.memory_space<vmem>>, vector<2x1xf32>
    %58 = arith.mulf %53, %57 : vector<2x1xf32>
    %cst_27 = arith.constant dense<0.000000e+00> : vector<2xf32>
    %59 = vector.multi_reduction <add>, %56, %cst_27 [1] : vector<2x128xf32> to vector<2xf32>
    %60 = vector.shape_cast %59 : vector<2xf32> to vector<2x1xf32>
    %61 = arith.addf %58, %60 : vector<2x1xf32>
    %c0_28 = arith.constant 0 : index
    %c0_29 = arith.constant 0 : index
    %62 = vector.load %arg14[%c0_28, %c0_29] : memref<2x1xf32, #tpu.memory_space<vmem>>, vector<2x1xf32>
    tpu.vector_store %arg14[%c0_28, %c0_29], %61 {strides = array<i32>} : memref<2x1xf32, #tpu.memory_space<vmem>>, vector<2x1xf32>,
    %c0_30 = arith.constant 0 : index
    %c0_31 = arith.constant 0 : index
    %63 = vector.load %arg15[%c0_30, %c0_31] : memref<2x128xf32, #tpu.memory_space<vmem>>, vector<2x128xf32>
    %64 = vector.broadcast %53 : vector<2x1xf32> to vector<2x128xf32>
    %65 = arith.mulf %64, %63 : vector<2x128xf32>
    %66 = arith.truncf %56 : vector<2x128xf32> to vector<2x128xbf16>
    %cst_32 = arith.constant dense<0.000000e+00> : vector<2x128xf32>
    %67 = tpu.matmul %66, %19, %cst_32 {dimension_numbers = #tpu.dot_dimension_numbers<[1], [0], [0], [1], [0, 0, 1, 1], [], []>} : vector<2x128xbf16>, vector<128x128xbf16>, vector<2x128xf32> -> vector<2x128xf32>
    %68 = arith.addf %65, %67 : vector<2x128xf32>
    %c0_33 = arith.constant 0 : index
    %c0_34 = arith.constant 0 : index
    %69 = vector.load %arg15[%c0_33, %c0_34] : memref<2x128xf32, #tpu.memory_space<vmem>>, vector<2x128xf32>
    tpu.vector_store %arg15[%c0_33, %c0_34], %68 {strides = array<i32>} : memref<2x128xf32, #tpu.memory_space<vmem>>, vector<2x128xf32>,
    %c0_35 = arith.constant 0 : index
    %c0_36 = arith.constant 0 : index
    %70 = vector.load %arg13[%c0_35, %c0_36] : memref<2x1xf32, #tpu.memory_space<vmem>>, vector<2x1xf32>
    tpu.vector_store %arg13[%c0_35, %c0_36], %51 {strides = array<i32>} : memref<2x1xf32, #tpu.memory_space<vmem>>, vector<2x1xf32>,
    %c1_i32 = arith.constant 1 : i32
    %71 = arith.cmpi eq, %arg1, %c1_i32 : i32
    %72 = arith.extui %71 : i1 to i32
    %c0_i32_37 = arith.constant 0 : i32
    %73 = arith.cmpi ne, %72, %c0_i32_37 : i32
    scf.if %73 {
      %c0_38 = arith.constant 0 : index
      %c0_39 = arith.constant 0 : index
      %74 = vector.load %arg13[%c0_38, %c0_39] : memref<2x1xf32, #tpu.memory_space<vmem>>, vector<2x1xf32>
      %c0_40 = arith.constant 0 : index
      %c0_41 = arith.constant 0 : index
      %c0_42 = arith.constant 0 : index
      %75 = vector.load %arg9[%c0_40, %c0_41, %c0_42] : memref<1x2x1xf32, #tpu.memory_space<vmem>>, vector<1x2x1xf32>
      %76 = vector.shape_cast %75 : vector<1x2x1xf32> to vector<2x1xf32>
      %77 = vector.shape_cast %74 : vector<2x1xf32> to vector<1x2x1xf32>
      tpu.vector_store %arg9[%c0_40, %c0_41, %c0_42], %77 {strides = array<i32>} : memref<1x2x1xf32, #tpu.memory_space<vmem>>, vector<1x2x1xf32>,
      %c0_43 = arith.constant 0 : index
      %c0_44 = arith.constant 0 : index
      %78 = vector.load %arg14[%c0_43, %c0_44] : memref<2x1xf32, #tpu.memory_space<vmem>>, vector<2x1xf32>
      %c0_45 = arith.constant 0 : index
      %c0_46 = arith.constant 0 : index
      %c0_47 = arith.constant 0 : index
      %79 = vector.load %arg10[%c0_45, %c0_46, %c0_47] : memref<1x2x1xf32, #tpu.memory_space<vmem>>, vector<1x2x1xf32>
      %80 = vector.shape_cast %79 : vector<1x2x1xf32> to vector<2x1xf32>
      %81 = vector.shape_cast %78 : vector<2x1xf32> to vector<1x2x1xf32>
      tpu.vector_store %arg10[%c0_45, %c0_46, %c0_47], %81 {strides = array<i32>} : memref<1x2x1xf32, #tpu.memory_space<vmem>>, vector<1x2x1xf32>,
      %c0_48 = arith.constant 0 : index
      %c0_49 = arith.constant 0 : index
      %82 = vector.load %arg15[%c0_48, %c0_49] : memref<2x128xf32, #tpu.memory_space<vmem>>, vector<2x128xf32>
      %c0_50 = arith.constant 0 : index
      %c0_51 = arith.constant 0 : index
      %c0_52 = arith.constant 0 : index
      %83 = vector.load %arg11[%c0_50, %c0_51, %c0_52] : memref<1x2x128xf32, #tpu.memory_space<vmem>>, vector<1x2x128xf32>
      %84 = vector.shape_cast %83 : vector<1x2x128xf32> to vector<2x128xf32>
      %85 = vector.shape_cast %82 : vector<2x128xf32> to vector<1x2x128xf32>
      tpu.vector_store %arg11[%c0_50, %c0_51, %c0_52], %85 {strides = array<i32>} : memref<1x2x128xf32, #tpu.memory_space<vmem>>, vector<1x2x128xf32>,
    } else {
    }
    return
  }
  func.func @transform_0(%arg0: i32, %arg1: i32) -> (i32, i32) {
    %c2_i32 = arith.constant 2 : i32
    %0 = arith.muli %arg0, %c2_i32 : i32
    %1 = arith.addi %0, %arg1 : i32
    %c0_i32 = arith.constant 0 : i32
    %c0_i32_0 = arith.constant 0 : i32
    return %1, %c0_i32 : i32, i32
  }
  func.func @transform_1(%arg0: i32, %arg1: i32) -> (i32, i32) {
    %c0_i32 = arith.constant 0 : i32
    %c0_i32_0 = arith.constant 0 : i32
    %c0_i32_1 = arith.constant 0 : i32
    return %c0_i32, %c0_i32_0 : i32, i32
  }
  func.func @transform_2(%arg0: i32, %arg1: i32) -> (i32, i32) {
    %c0_i32 = arith.constant 0 : i32
    %c0_i32_0 = arith.constant 0 : i32
    %c0_i32_1 = arith.constant 0 : i32
    return %c0_i32, %c0_i32_0 : i32, i32
  }
  func.func @transform_3(%arg0: i32, %arg1: i32) -> (i32, i32) {
    %c0_i32 = arith.constant 0 : i32
    %c0_i32_0 = arith.constant 0 : i32
    %c0_i32_1 = arith.constant 0 : i32
    return %c0_i32, %c0_i32_0 : i32, i32
  }
  func.func @transform_4(%arg0: i32, %arg1: i32) -> (i32, i32) {
    %c0_i32 = arith.constant 0 : i32
    %c0_i32_0 = arith.constant 0 : i32
    %c0_i32_1 = arith.constant 0 : i32
    return %c0_i32, %c0_i32_0 : i32, i32
  }
  func.func @transform_5(%arg0: i32, %arg1: i32) -> (i32, i32) {
    %c0_i32 = arith.constant 0 : i32
    %c0_i32_0 = arith.constant 0 : i32
    %c0_i32_1 = arith.constant 0 : i32
    return %c0_i32, %c0_i32_0 : i32, i32
  }
  func.func @transform_6(%arg0: i32, %arg1: i32) -> (i32, i32) {
    %c0_i32 = arith.constant 0 : i32
    %c0_i32_0 = arith.constant 0 : i32
    %c0_i32_1 = arith.constant 0 : i32
    return %c0_i32, %c0_i32_0 : i32, i32
  }
  func.func @transform_7(%arg0: i32, %arg1: i32) -> (i32, i32, i32) {
    %c0_i32 = arith.constant 0 : i32
    %c0_i32_0 = arith.constant 0 : i32
    %c0_i32_1 = arith.constant 0 : i32
    return %arg0, %c0_i32, %c0_i32_0 : i32, i32, i32
  }
  func.func @transform_8(%arg0: i32, %arg1: i32) -> (i32, i32, i32) {
    %c0_i32 = arith.constant 0 : i32
    %c0_i32_0 = arith.constant 0 : i32
    %c0_i32_1 = arith.constant 0 : i32
    return %arg0, %c0_i32, %c0_i32_0 : i32, i32, i32
  }
  func.func @transform_9(%arg0: i32, %arg1: i32) -> (i32, i32, i32) {
    %c0_i32 = arith.constant 0 : i32
    %c0_i32_0 = arith.constant 0 : i32
    %c0_i32_1 = arith.constant 0 : i32
    return %arg0, %c0_i32, %c0_i32_0 : i32, i32, i32
  }
  func.func @transform_10(%arg0: i32, %arg1: i32) -> (i32, i32) {
    %c2_i32 = arith.constant 2 : i32
    %0 = arith.muli %arg0, %c2_i32 : i32
    %1 = arith.addi %0, %arg1 : i32
    %c0_i32 = arith.constant 0 : i32
    %c0_i32_0 = arith.constant 0 : i32
    return %c0_i32, %1 : i32, i32
  }
}

</mosaic_0001>

<llo_original>
// kernel: tpu_custom_call.1
$region0: #{tpu_custom_call.1}
  #allocation0 [shape = 'u32[]', space=smem, size = 0x4, offset = 0x4, fixed_abs, tag = 'smem constant byte address 0x4 - core index']
  #allocation1 [shape = 'u32[144,128]{1,0:T(1,128)}', space=vmem, size = 0x12000, scoped, tag = 'internal scratch']
  #allocation2 [shape = 'f32[2,1]{1,0:T(2,128)}', space=vmem, size = 0x400, scoped, tag = 'scratch operand']
  #allocation3 [shape = 'f32[2,1]{1,0:T(2,128)}', space=vmem, size = 0x400, scoped, tag = 'scratch operand']
  #allocation4 [shape = 'f32[2,128]{1,0:T(2,128)}', space=vmem, size = 0x400, scoped, tag = 'scratch operand']
  %s0 = inlined_call_operand.hbm [shape: bf16[512,256], index: 0, kind: input, shape index: {}]
  %s1 = inlined_call_operand.hbm [shape: bf16[256,128], index: 1, kind: input, shape index: {}]
  %s2 = inlined_call_operand.vmem [shape: f32[1,128], index: 2, kind: input, shape index: {}]
  %s3 = inlined_call_operand.hbm [shape: bf16[128,256], index: 3, kind: input, shape index: {}]
  %s4 = inlined_call_operand.vmem [shape: f32[1,256], index: 4, kind: input, shape index: {}]
  %s5 = inlined_call_operand.vmem [shape: f32[2,128], index: 5, kind: input, shape index: {}]
  %s6 = inlined_call_operand.vmem [shape: f32[2,1], index: 6, kind: input, shape index: {}]
  %s7 = inlined_call_operand.vmem [shape: f32[2,2,1], index: 7, kind: output, shape index: {0}]
  %s8 = inlined_call_operand.vmem [shape: f32[2,2,1], index: 8, kind: output, shape index: {1}]
  %s9 = inlined_call_operand.hbm [shape: f32[2,2,128], index: 9, kind: output, shape index: {2}]
  %s10 = inlined_call_operand.hbm [shape: f32[2,512], index: 10, kind: output, shape index: {3}]
  %11 = xla_tuple %s7, %s8, %s9, %s10
  %s12 = sld [smem:[#allocation0]]
  $region105: #{tpu_custom_call.1} parent=0
    _
  %s14 = ssub.s32 1, %s12
  %s15 = scalar_select 0, %s14, %s12
  $region1: #{tpu_custom_call.1} parent=0
    #allocation5 [shape = 'u8[131072]{0}', space=vmem, size = 0x20000, scoped, tag = 'input window, operand 0']
    #allocation6 [shape = 's32[2]{0}', space=sflag, size = 0x8, scoped, tag = 'scoped memory for tpu_custom_call.1']
    #allocation7 [shape = 's32[2]{0}', space=sflag, size = 0x8, scoped, tag = 'scoped memory for tpu_custom_call.1']
    #allocation8 [shape = 'u8[65536]{0}', space=vmem, size = 0x10000, scoped, tag = 'input window, operand 1, single buffered']
    #allocation9 [shape = 's32[1]{0}', space=sflag, size = 0x4, scoped, tag = 'scoped memory for tpu_custom_call.1']
    #allocation10 [shape = 'u8[65536]{0}', space=vmem, size = 0x10000, scoped, tag = 'input window, operand 3, single buffered']
    #allocation11 [shape = 'u8[2048]{0}', space=vmem, size = 0x800, scoped, tag = 'output window, operand 2']
    #allocation12 [shape = 'u8[2048]{0}', space=vmem, size = 0x800, scoped, tag = 'output window, operand 3']
    #allocation13 [shape = 's32[2]{0}', space=sflag, size = 0x8, scoped, tag = 'scoped memory for tpu_custom_call.1']
    %16 = vsyncpa [#allocation6], 0
    %s17 = scalar_lea.sflag [#allocation6], 1
    %18 = vsyncpa %s17, 0
    %19 = vsyncpa [#allocation9], 0
    %20 = vsyncpa [#allocation7], 0
    %s21 = scalar_lea.sflag [#allocation7], 1
    %22 = vsyncpa %s21, 0
    %23 = vsyncpa [#allocation13], 0
    %s24 = scalar_lea.sflag [#allocation13], 1
    %25 = vsyncpa %s24, 0
    loop: start=0, step=1, limit=6
    $region2: #{tpu_custom_call.1} parent=1 // loop_pre_header
      _
    $region3: #{tpu_custom_call.1} parent=1 // loop_header
      %s27 = sphi 0, %s31
      %p28 = scmp.ge.s32.totalorder %s27, 6
      %s34 = sphi 0, %s46
      %s35 = sphi 0, %s42
      %s36 = sphi 0, %s34
      %s37 = sphi 0, %s35
      %s38 = sphi 0, %s36
      %s39 = sphi 0, %s37
      %s53 = sphi 0, %s55
      %s56 = sphi 0, %s53
      %s57 = sphi 0, %s56
      %s73 = sphi 0, %s57
      %s77 = sphi 0, %s77
      %s79 = sphi 0, %s77
      %s80 = sphi 0, %s79
      %s94 = sphi 0, %s80
      %s98 = sphi 0, %s98
      %s100 = sphi 0, %s98
      %s101 = sphi 0, %s100
      %s115 = sphi 0, %s101
      %s119 = sphi 0, %s119
      %s121 = sphi 0, %s119
      %s122 = sphi 0, %s121
      %s136 = sphi 0, %s122
      %s140 = sphi 0, %s140
      %s142 = sphi 0, %s140
      %s143 = sphi 0, %s142
      %s157 = sphi 0, %s143
      %s161 = sphi 0, %s161
      %s163 = sphi 0, %s161
      %s164 = sphi 0, %s163
      %s178 = sphi 0, %s164
      %s182 = sphi 0, %s182
      %s184 = sphi 0, %s182
      %s185 = sphi 0, %s184
      %s199 = sphi 0, %s185
      %s205 = sphi 0, %s207
      %s208 = sphi 0, %s205
      %s209 = sphi 0, %s208
      %s225 = sphi 0, %s209
      %s231 = sphi 0, %s233
      %s234 = sphi 0, %s231
      %s235 = sphi 0, %s234
      %s251 = sphi 0, %s235
      %s257 = sphi 0, %s259
      %s260 = sphi 0, %s257
      %s261 = sphi 0, %s260
      %s277 = sphi 0, %s261
      %s287 = sphi 0, %s289
      %s290 = sphi 0, %s287
      %s291 = sphi 0, %s290
      %s307 = sphi 0, %s291
    $region4: #{tpu_custom_call.1} parent=1 // loop_header_branch
      %30 = sbr.rel (%p28) target = $region8
    $region5: #{tpu_custom_call.1} parent=1 // loop_body
      %s32 = ssub.s32 %s27, 1
      %s33 = ssub.s32 %s27, 2
      %s40 = sadd.s32 1, %s35
      %p41 = scmp.ge.s32.totalorder %s40, 2
      %s42 = scalar_select %p41, 0, %s40
      %s43 = sadd.s32 1, %s34
      %s44 = scalar_select %p41, %s43, %s34
      %p45 = scmp.ge.s32.totalorder %s44, 2
      %s46 = scalar_select %p45, 0, %s44
      %s47 = smul.u32 %s34, 2
      %s48 = sadd.s32 %s47, %s35
      %s49 = smul.u32 %s46, 2
      %s50 = sadd.s32 %s49, %s42
      %s51 = ssub.s32 %s48, %s50
      %p52 = scmp.eq.s32.totalorder %s51, 0
      %s54 = sadd.s32 %s53, 1
      %s55 = scalar_select %p52, %s53, %s54
      %p58 = pneg %p52
      %p59 = scmp.eq.s32.totalorder %s27, 3
      %p60 = por %p58, %p59
      %p61 = scmp.ne.s32.totalorder %s53, %s56
      %p62 = scmp.eq.s32.totalorder %s27, 0
      %p63 = por %p61, %p62
      %p64 = scmp.ne.s32.totalorder %s53, %s56
      %p65 = scmp.eq.s32.totalorder %s32, 3
      %p66 = por %p64, %p65
      %p67 = scmp.ne.s32.totalorder %s56, %s57
      %p68 = scmp.eq.s32.totalorder %s32, 0
      %p69 = por %p67, %p68
      %p70 = scmp.ne.s32.totalorder %s56, %s57
      %p71 = scmp.eq.s32.totalorder %s33, 3
      %p72 = por %p70, %p71
      %p74 = scmp.ne.s32.totalorder %s57, %s73
      %p75 = scmp.eq.s32.totalorder %s33, 0
      %p76 = por %p74, %p75
      %s78 = sadd.s32 %s77, 1
      %p81 = scmp.eq.s32.totalorder %s27, 3
      %p82 = scmp.ne.s32.totalorder %s77, %s79
      %p83 = scmp.eq.s32.totalorder %s27, 0
      %p84 = por %p82, %p83
      %p85 = scmp.ne.s32.totalorder %s77, %s79
      %p86 = scmp.eq.s32.totalorder %s32, 3
      %p87 = por %p85, %p86
      %p88 = scmp.ne.s32.totalorder %s79, %s80
      %p89 = scmp.eq.s32.totalorder %s32, 0
      %p90 = por %p88, %p89
      %p91 = scmp.ne.s32.totalorder %s79, %s80
      %p92 = scmp.eq.s32.totalorder %s33, 3
      %p93 = por %p91, %p92
      %p95 = scmp.ne.s32.totalorder %s80, %s94
      %p96 = scmp.eq.s32.totalorder %s33, 0
      %p97 = por %p95, %p96
      %s99 = sadd.s32 %s98, 1
      %p102 = scmp.eq.s32.totalorder %s27, 3
      %p103 = scmp.ne.s32.totalorder %s98, %s100
      %p104 = scmp.eq.s32.totalorder %s27, 0
      %p105 = por %p103, %p104
      %p106 = scmp.ne.s32.totalorder %s98, %s100
      %p107 = scmp.eq.s32.totalorder %s32, 3
      %p108 = por %p106, %p107
      %p109 = scmp.ne.s32.totalorder %s100, %s101
      %p110 = scmp.eq.s32.totalorder %s32, 0
      %p111 = por %p109, %p110
      %p112 = scmp.ne.s32.totalorder %s100, %s101
      %p113 = scmp.eq.s32.totalorder %s33, 3
      %p114 = por %p112, %p113
      %p116 = scmp.ne.s32.totalorder %s101, %s115
      %p117 = scmp.eq.s32.totalorder %s33, 0
      %p118 = por %p116, %p117
      %s120 = sadd.s32 %s119, 1
      %p123 = scmp.eq.s32.totalorder %s27, 3
      %p124 = scmp.ne.s32.totalorder %s119, %s121
      %p125 = scmp.eq.s32.totalorder %s27, 0
      %p126 = por %p124, %p125
      %p127 = scmp.ne.s32.totalorder %s119, %s121
      %p128 = scmp.eq.s32.totalorder %s32, 3
      %p129 = por %p127, %p128
      %p130 = scmp.ne.s32.totalorder %s121, %s122
      %p131 = scmp.eq.s32.totalorder %s32, 0
      %p132 = por %p130, %p131
      %p133 = scmp.ne.s32.totalorder %s121, %s122
      %p134 = scmp.eq.s32.totalorder %s33, 3
      %p135 = por %p133, %p134
      %p137 = scmp.ne.s32.totalorder %s122, %s136
      %p138 = scmp.eq.s32.totalorder %s33, 0
      %p139 = por %p137, %p138
      %s141 = sadd.s32 %s140, 1
      %p144 = scmp.eq.s32.totalorder %s27, 3
      %p145 = scmp.ne.s32.totalorder %s140, %s142
      %p146 = scmp.eq.s32.totalorder %s27, 0
      %p147 = por %p145, %p146
      %p148 = scmp.ne.s32.totalorder %s140, %s142
      %p149 = scmp.eq.s32.totalorder %s32, 3
      %p150 = por %p148, %p149
      %p151 = scmp.ne.s32.totalorder %s142, %s143
      %p152 = scmp.eq.s32.totalorder %s32, 0
      %p153 = por %p151, %p152
      %p154 = scmp.ne.s32.totalorder %s142, %s143
      %p155 = scmp.eq.s32.totalorder %s33, 3
      %p156 = por %p154, %p155
      %p158 = scmp.ne.s32.totalorder %s143, %s157
      %p159 = scmp.eq.s32.totalorder %s33, 0
      %p160 = por %p158, %p159
      %s162 = sadd.s32 %s161, 1
      %p165 = scmp.eq.s32.totalorder %s27, 3
      %p166 = scmp.ne.s32.totalorder %s161, %s163
      %p167 = scmp.eq.s32.totalorder %s27, 0
      %p168 = por %p166, %p167
      %p169 = scmp.ne.s32.totalorder %s161, %s163
      %p170 = scmp.eq.s32.totalorder %s32, 3
      %p171 = por %p169, %p170
      %p172 = scmp.ne.s32.totalorder %s163, %s164
      %p173 = scmp.eq.s32.totalorder %s32, 0
      %p174 = por %p172, %p173
      %p175 = scmp.ne.s32.totalorder %s163, %s164
      %p176 = scmp.eq.s32.totalorder %s33, 3
      %p177 = por %p175, %p176
      %p179 = scmp.ne.s32.totalorder %s164, %s178
      %p180 = scmp.eq.s32.totalorder %s33, 0
      %p181 = por %p179, %p180
      %s183 = sadd.s32 %s182, 1
      %p186 = scmp.eq.s32.totalorder %s27, 3
      %p187 = scmp.ne.s32.totalorder %s182, %s184
      %p188 = scmp.eq.s32.totalorder %s27, 0
      %p189 = por %p187, %p188
      %p190 = scmp.ne.s32.totalorder %s182, %s184
      %p191 = scmp.eq.s32.totalorder %s32, 3
      %p192 = por %p190, %p191
      %p193 = scmp.ne.s32.totalorder %s184, %s185
      %p194 = scmp.eq.s32.totalorder %s32, 0
      %p195 = por %p193, %p194
      %p196 = scmp.ne.s32.totalorder %s184, %s185
      %p197 = scmp.eq.s32.totalorder %s33, 3
      %p198 = por %p196, %p197
      %p200 = scmp.ne.s32.totalorder %s185, %s199
      %p201 = scmp.eq.s32.totalorder %s33, 0
      %p202 = por %p200, %p201
      %s203 = ssub.s32 %s34, %s46
      %p204 = scmp.eq.s32.totalorder %s203, 0
      %s206 = sadd.s32 %s205, 1
      %s207 = scalar_select %p204, %s205, %s206
      %p210 = pneg %p204
      %p211 = scmp.eq.s32.totalorder %s27, 3
      %p212 = por %p210, %p211
      %p213 = scmp.ne.s32.totalorder %s205, %s208
      %p214 = scmp.eq.s32.totalorder %s27, 0
      %p215 = por %p213, %p214
      %p216 = scmp.ne.s32.totalorder %s205, %s208
      %p217 = scmp.eq.s32.totalorder %s32, 3
      %p218 = por %p216, %p217
      %p219 = scmp.ne.s32.totalorder %s208, %s209
      %p220 = scmp.eq.s32.totalorder %s32, 0
      %p221 = por %p219, %p220
      %p222 = scmp.ne.s32.totalorder %s208, %s209
      %p223 = scmp.eq.s32.totalorder %s33, 3
      %p224 = por %p222, %p223
      %p226 = scmp.ne.s32.totalorder %s209, %s225
      %p227 = scmp.eq.s32.totalorder %s33, 0
      %p228 = por %p226, %p227
      %s229 = ssub.s32 %s34, %s46
      %p230 = scmp.eq.s32.totalorder %s229, 0
      %s232 = sadd.s32 %s231, 1
      %s233 = scalar_select %p230, %s231, %s232
      %p236 = pneg %p230
      %p237 = scmp.eq.s32.totalorder %s27, 3
      %p238 = por %p236, %p237
      %p239 = scmp.ne.s32.totalorder %s231, %s234
      %p240 = scmp.eq.s32.totalorder %s27, 0
      %p241 = por %p239, %p240
      %p242 = scmp.ne.s32.totalorder %s231, %s234
      %p243 = scmp.eq.s32.totalorder %s32, 3
      %p244 = por %p242, %p243
      %p245 = scmp.ne.s32.totalorder %s234, %s235
      %p246 = scmp.eq.s32.totalorder %s32, 0
      %p247 = por %p245, %p246
      %p248 = scmp.ne.s32.totalorder %s234, %s235
      %p249 = scmp.eq.s32.totalorder %s33, 3
      %p250 = por %p248, %p249
      %p252 = scmp.ne.s32.totalorder %s235, %s251
      %p253 = scmp.eq.s32.totalorder %s33, 0
      %p254 = por %p252, %p253
      %s255 = ssub.s32 %s34, %s46
      %p256 = scmp.eq.s32.totalorder %s255, 0
      %s258 = sadd.s32 %s257, 1
      %s259 = scalar_select %p256, %s257, %s258
      %p262 = pneg %p256
      %p263 = scmp.eq.s32.totalorder %s27, 3
      %p264 = por %p262, %p263
      %p265 = scmp.ne.s32.totalorder %s257, %s260
      %p266 = scmp.eq.s32.totalorder %s27, 0
      %p267 = por %p265, %p266
      %p268 = scmp.ne.s32.totalorder %s257, %s260
      %p269 = scmp.eq.s32.totalorder %s32, 3
      %p270 = por %p268, %p269
      %p271 = scmp.ne.s32.totalorder %s260, %s261
      %p272 = scmp.eq.s32.totalorder %s32, 0
      %p273 = por %p271, %p272
      %p274 = scmp.ne.s32.totalorder %s260, %s261
      %p275 = scmp.eq.s32.totalorder %s33, 3
      %p276 = por %p274, %p275
      %p278 = scmp.ne.s32.totalorder %s261, %s277
      %p279 = scmp.eq.s32.totalorder %s33, 0
      %p280 = por %p278, %p279
      %s281 = smul.u32 %s34, 2
      %s282 = sadd.s32 %s281, %s35
      %s283 = smul.u32 %s46, 2
      %s284 = sadd.s32 %s283, %s42
      %s285 = ssub.s32 %s282, %s284
      %p286 = scmp.eq.s32.totalorder %s285, 0
      %s288 = sadd.s32 %s287, 1
      %s289 = scalar_select %p286, %s287, %s288
      %p292 = pneg %p286
      %p293 = scmp.eq.s32.totalorder %s27, 3
      %p294 = por %p292, %p293
      %p295 = scmp.ne.s32.totalorder %s287, %s290
      %p296 = scmp.eq.s32.totalorder %s27, 0
      %p297 = por %p295, %p296
      %p298 = scmp.ne.s32.totalorder %s287, %s290
      %p299 = scmp.eq.s32.totalorder %s32, 3
      %p300 = por %p298, %p299
      %p301 = scmp.ne.s32.totalorder %s290, %s291
      %p302 = scmp.eq.s32.totalorder %s32, 0
      %p303 = por %p301, %p302
      %p304 = scmp.ne.s32.totalorder %s290, %s291
      %p305 = scmp.eq.s32.totalorder %s33, 3
      %p306 = por %p304, %p305
      %p308 = scmp.ne.s32.totalorder %s291, %s307
      %p309 = scmp.eq.s32.totalorder %s33, 0
      %p310 = por %p308, %p309
      %p311 = scmp.le.s32.totalorder 1, %s27
      %p312 = scmp.lt.s32.totalorder %s27, 5
      %p313 = pnand %p311, %p312
      %p314 = pneg %p313
      // Predicated region
      $region9: #{tpu_custom_call.1} parent=5 // pred_check
        _
      $region10: #{tpu_custom_call.1} parent=5 // pred_check_branch
        %316 = sbr.rel (%p313) target = $region12
      $region11: #{tpu_custom_call.1} parent=5 // pred_region
        %s317 = ssub.s32 %s27, 1
        // Predicated region
        $region13: #{tpu_custom_call.1} parent=11 // pred_check
          %p318 = pneg %p90
        $region14: #{tpu_custom_call.1} parent=11 // pred_check_branch
          %320 = sbr.rel (%p318) target = $region16
        $region15: #{tpu_custom_call.1} parent=11 // pred_region
          %s322 = ssub.s32 2048, 2048
          %323 = vsyncadd [#allocation9], %s322
          %s324 = sshll.u32 [#allocation8], 4
          %s325 = int_to_ptr.vmem [resolvable:$true] %s324
          %330 = dma.hbm_to_vmem [thread:$0]  %s1, 2048, %s325, [#allocation9], 64, 64, 4
        $region16: #{tpu_custom_call.1} parent=11 // pred_fallthru
          _
        // Predicated region
        $region17: #{tpu_custom_call.1} parent=11 // pred_check
          %p331 = pneg %p111
        $region18: #{tpu_custom_call.1} parent=11 // pred_check_branch
          %333 = sbr.rel (%p331) target = $region20
        $region19: #{tpu_custom_call.1} parent=11 // pred_region
          _
        $region20: #{tpu_custom_call.1} parent=11 // pred_fallthru
          _
        // Predicated region
        $region21: #{tpu_custom_call.1} parent=11 // pred_check
          %p334 = pneg %p132
        $region22: #{tpu_custom_call.1} parent=11 // pred_check_branch
          %336 = sbr.rel (%p334) target = $region24
        $region23: #{tpu_custom_call.1} parent=11 // pred_region
          %s338 = ssub.s32 2048, 2048
          %339 = vsyncadd [#allocation9], %s338
          %s340 = sshll.u32 [#allocation10], 4
          %s341 = int_to_ptr.vmem [resolvable:$true] %s340
          %346 = dma.hbm_to_vmem [thread:$0]  %s3, 2048, %s341, [#allocation9], 128, 128, 8
        $region24: #{tpu_custom_call.1} parent=11 // pred_fallthru
          _
        // Predicated region
        $region25: #{tpu_custom_call.1} parent=11 // pred_check
          %p347 = pneg %p153
        $region26: #{tpu_custom_call.1} parent=11 // pred_check_branch
          %349 = sbr.rel (%p347) target = $region28
        $region27: #{tpu_custom_call.1} parent=11 // pred_region
          _
        $region28: #{tpu_custom_call.1} parent=11 // pred_fallthru
          _
        // Predicated region
        $region29: #{tpu_custom_call.1} parent=11 // pred_check
          %p350 = pneg %p174
        $region30: #{tpu_custom_call.1} parent=11 // pred_check_branch
          %352 = sbr.rel (%p350) target = $region32
        $region31: #{tpu_custom_call.1} parent=11 // pred_region
          _
        $region32: #{tpu_custom_call.1} parent=11 // pred_fallthru
          _
        // Predicated region
        $region33: #{tpu_custom_call.1} parent=11 // pred_check
          %p353 = pneg %p195
        $region34: #{tpu_custom_call.1} parent=11 // pred_check_branch
          %355 = sbr.rel (%p353) target = $region36
        $region35: #{tpu_custom_call.1} parent=11 // pred_region
          _
        $region36: #{tpu_custom_call.1} parent=11 // pred_fallthru
          _
      $region12: #{tpu_custom_call.1} parent=5 // pred_fallthru
        _
      %p356 = scmp.lt.s32.totalorder %s27, 4
      // Predicated region
      $region37: #{tpu_custom_call.1} parent=5 // pred_check
        %p357 = pneg %p356
      $region38: #{tpu_custom_call.1} parent=5 // pred_check_branch
        %359 = sbr.rel (%p357) target = $region40
      $region39: #{tpu_custom_call.1} parent=5 // pred_region
        // Predicated region
        $region41: #{tpu_custom_call.1} parent=39 // pred_check
          %p360 = pneg %p63
        $region42: #{tpu_custom_call.1} parent=39 // pred_check_branch
          %362 = sbr.rel (%p360) target = $region44
        $region43: #{tpu_custom_call.1} parent=39 // pred_region
          %s363 = sand.u32 %s53, 1
          %s364 = scalar_lea.sflag [#allocation6], %s363
          %s365 = sand.u32 %s53, 1
          %s366 = smul.addr %s365, 128
          %s367 = scalar_lea.vmem [#allocation5], %s366
          %s368 = smul.u32 %s34, 2
          %s369 = sadd.s32 %s368, %s35
          %s370 = smul.u32 16, %s369
          %s372 = ssub.s32 2048, 2048
          %373 = vsyncadd %s364, %s372
          %s374 = smul.addr %s370, 2
          %s375 = smul.addr %s374, 64
          %s376 = scalar_lea.hbm %s0, %s375
          %s377 = sshll.u32 %s367, 4
          %s378 = int_to_ptr.vmem [resolvable:$true] %s377
          %383 = dma.hbm_to_vmem [thread:$0]  %s376, 2048, %s378, %s364, 128, 128, 8
        $region44: #{tpu_custom_call.1} parent=39 // pred_fallthru
          _
      $region40: #{tpu_custom_call.1} parent=5 // pred_fallthru
        _
      %p384 = scmp.le.s32.totalorder 1, %s27
      %p385 = scmp.lt.s32.totalorder %s27, 5
      %p386 = pnand %p384, %p385
      %p387 = pneg %p386
      // Predicated region
      $region45: #{tpu_custom_call.1} parent=5 // pred_check
        _
      $region46: #{tpu_custom_call.1} parent=5 // pred_check_branch
        %389 = sbr.rel (%p386) target = $region48
      $region47: #{tpu_custom_call.1} parent=5 // pred_region
        %s390 = ssub.s32 %s27, 1
        %s391 = sand.u32 %s56, 1
        %s392 = scalar_lea.sflag [#allocation6], %s391
        %s393 = sand.u32 %s56, 1
        %s394 = smul.addr %s393, 128
        %s395 = scalar_lea.vmem [#allocation5], %s394
        // Predicated region
        $region49: #{tpu_custom_call.1} parent=47 // pred_check
          %p396 = pneg %p69
        $region50: #{tpu_custom_call.1} parent=47 // pred_check_branch
          %398 = sbr.rel (%p396) target = $region52
        $region51: #{tpu_custom_call.1} parent=47 // pred_region
          %399 = dma.done %s392, 2048
        $region52: #{tpu_custom_call.1} parent=47 // pred_fallthru
          _
        // Predicated region
        $region53: #{tpu_custom_call.1} parent=47 // pred_check
          %p400 = pneg %p90
        $region54: #{tpu_custom_call.1} parent=47 // pred_check_branch
          %402 = sbr.rel (%p400) target = $region56
        $region55: #{tpu_custom_call.1} parent=47 // pred_region
          %403 = dma.done [#allocation9], 2048
        $region56: #{tpu_custom_call.1} parent=47 // pred_fallthru
          _
        // Predicated region
        $region57: #{tpu_custom_call.1} parent=47 // pred_check
          %p404 = pneg %p132
        $region58: #{tpu_custom_call.1} parent=47 // pred_check_branch
          %406 = sbr.rel (%p404) target = $region60
        $region59: #{tpu_custom_call.1} parent=47 // pred_region
          %407 = dma.done [#allocation9], 2048
        $region60: #{tpu_custom_call.1} parent=47 // pred_fallthru
          _
        %s408 = sand.u32 %s56, 1
        %s409 = scalar_lea.sflag [#allocation6], %s408
        %s410 = sand.u32 %s56, 1
        %s411 = smul.addr %s410, 128
        %s412 = scalar_lea.vmem [#allocation5], %s411
        %p413 = pneg %p69
        %p414 = pneg %p66
        %p415 = pneg %p90
        %p416 = pneg %p87
        %p417 = pneg %p111
        %p418 = pneg %p108
        %p419 = pneg %p132
        %p420 = pneg %p129
        %p421 = pneg %p153
        %p422 = pneg %p150
        %p423 = pneg %p174
        %p424 = pneg %p171
        %p425 = pneg %p195
        %p426 = pneg %p192
        %p427 = pneg %p221
        %p428 = pneg %p218
        %p429 = scmp.lt.s32.totalorder %s36, 1
        %s430 = scalar_select %p429, %s36, 1
        %s431 = smul.addr %s430, 2
        %s432 = scalar_lea.vmem %s7, %s431
        %p433 = pneg %p247
        %p434 = pneg %p244
        %p435 = scmp.lt.s32.totalorder %s36, 1
        %s436 = scalar_select %p435, %s36, 1
        %s437 = smul.addr %s436, 2
        %s438 = scalar_lea.vmem %s8, %s437
        %p439 = pneg %p273
        %p440 = pneg %p270
        %s441 = sand.u32 %s260, 1
        %s442 = scalar_lea.sflag [#allocation7], %s441
        %s443 = sand.u32 %s260, 1
        %s444 = smul.addr %s443, 2
        %s445 = scalar_lea.vmem [#allocation11], %s444
        %p446 = pneg %p303
        %p447 = pneg %p300
        %s448 = sand.u32 %s290, 1
        %s449 = scalar_lea.sflag [#allocation13], %s448
        %s450 = sand.u32 %s290, 1
        %s451 = smul.addr %s450, 2
        %s452 = scalar_lea.vmem [#allocation12], %s451
        %s453 = smul.u32 %s36, 2
        %s454 = sadd.s32 %s453, %s37
        %s455 = smul.u32 16, %s454
        %p456 = scmp.lt.s32.totalorder %s36, 1
        %s457 = scalar_select %p456, %s36, 1
        %s458 = smul.addr %s457, 2
        %s459 = scalar_lea.vmem %s7, %s458
        %p460 = scmp.lt.s32.totalorder %s36, 1
        %s461 = scalar_select %p460, %s36, 1
        %s462 = smul.addr %s461, 2
        %s463 = scalar_lea.vmem %s8, %s462
        %s464 = smul.u32 %s36, 2
        %s465 = sadd.s32 %s464, %s37
        %p467 = scmp.eq.s32.totalorder %s37, 0
        // Predicated region
        $region61: #{tpu_custom_call.1} parent=47 // pred_check
          %p468 = pneg %p467
        $region62: #{tpu_custom_call.1} parent=47 // pred_check_branch
          %470 = sbr.rel (%p468) target = $region64
        $region63: #{tpu_custom_call.1} parent=47 // pred_region
          %vm471 = vcmask 1024
          %472 = vst.msk [vmem:[#allocation2] sm:$0x3] %vm471, -1e+30
          %473 = vst.msk [vmem:[#allocation3] sm:$0x3] %vm471, 0.0
          %474 = vst [vmem:[#allocation4] sm:$0x3] 0.0
        $region64: #{tpu_custom_call.1} parent=47 // pred_fallthru
          _
        %s475 = smul.u32 %s36, 2
        %s476 = sadd.s32 %s475, %s37
        %s477 = smul.u32 %s476, 128
        %v478 = vlaneseq
        %v479 = vand.u32 %v478, 127
        %v480 = vstv %s477
        %v481 = vadd.s32 %v479, %v480
        %vm482 = vcmp.lt.s32.totalorder %v481, 300
        %v483 = vld [vmem:[%s395] sm:$0xff]
        %v484 = vld [vmem:[%s395 + $0x8] sm:$0xff]
        %v485 = vld [vmem:[%s395 + $0x10] sm:$0xff]
        %v486 = vld [vmem:[%s395 + $0x18] sm:$0xff]
        %v487 = vld [vmem:[%s395 + $0x20] sm:$0xff]
        %v488 = vld [vmem:[%s395 + $0x28] sm:$0xff]
        %v489 = vld [vmem:[%s395 + $0x30] sm:$0xff]
        %v490 = vld [vmem:[%s395 + $0x38] sm:$0xff]
        %v491 = vld [vmem:[%s395 + $0x40] sm:$0xff]
        %v492 = vld [vmem:[%s395 + $0x48] sm:$0xff]
        %v493 = vld [vmem:[%s395 + $0x50] sm:$0xff]
        %v494 = vld [vmem:[%s395 + $0x58] sm:$0xff]
        %v495 = vld [vmem:[%s395 + $0x60] sm:$0xff]
        %v496 = vld [vmem:[%s395 + $0x68] sm:$0xff]
        %v497 = vld [vmem:[%s395 + $0x70] sm:$0xff]
        %v498 = vld [vmem:[%s395 + $0x78] sm:$0xff]
        %v499 = vld [vmem:[#allocation8] sm:$0xf]
        %v500 = vld [vmem:[#allocation8 + $0x4] sm:$0xf]
        %v501 = vld [vmem:[#allocation8 + $0x8] sm:$0xf]
        %v502 = vld [vmem:[#allocation8 + $0xc] sm:$0xf]
        %v503 = vld [vmem:[#allocation8 + $0x10] sm:$0xf]
        %v504 = vld [vmem:[#allocation8 + $0x14] sm:$0xf]
        %v505 = vld [vmem:[#allocation8 + $0x18] sm:$0xf]
        %v506 = vld [vmem:[#allocation8 + $0x1c] sm:$0xf]
        %v507 = vld [vmem:[#allocation8 + $0x20] sm:$0xf]
        %v508 = vld [vmem:[#allocation8 + $0x24] sm:$0xf]
        %v509 = vld [vmem:[#allocation8 + $0x28] sm:$0xf]
        %v510 = vld [vmem:[#allocation8 + $0x2c] sm:$0xf]
        %v511 = vld [vmem:[#allocation8 + $0x30] sm:$0xf]
        %v512 = vld [vmem:[#allocation8 + $0x34] sm:$0xf]
        %v513 = vld [vmem:[#allocation8 + $0x38] sm:$0xf]
        %v514 = vld [vmem:[#allocation8 + $0x3c] sm:$0xf]
        %v515 = vld [vmem:[#allocation8 + $0x40] sm:$0xf]
        %v516 = vld [vmem:[#allocation8 + $0x44] sm:$0xf]
        %v517 = vld [vmem:[#allocation8 + $0x48] sm:$0xf]
        %v518 = vld [vmem:[#allocation8 + $0x4c] sm:$0xf]
        %v519 = vld [vmem:[#allocation8 + $0x50] sm:$0xf]
        %v520 = vld [vmem:[#allocation8 + $0x54] sm:$0xf]
        %v521 = vld [vmem:[#allocation8 + $0x58] sm:$0xf]
        %v522 = vld [vmem:[#allocation8 + $0x5c] sm:$0xf]
        %v523 = vld [vmem:[#allocation8 + $0x60] sm:$0xf]
        %v524 = vld [vmem:[#allocation8 + $0x64] sm:$0xf]
        %v525 = vld [vmem:[#allocation8 + $0x68] sm:$0xf]
        %v526 = vld [vmem:[#allocation8 + $0x6c] sm:$0xf]
        %v527 = vld [vmem:[#allocation8 + $0x70] sm:$0xf]
        %v528 = vld [vmem:[#allocation8 + $0x74] sm:$0xf]
        %v529 = vld [vmem:[#allocation8 + $0x78] sm:$0xf]
        %v530 = vld [vmem:[#allocation8 + $0x7c] sm:$0xf]
        %v531 = vld [vmem:[%s2] sm:$0x1]
        %v533 = vlaneseq
        %v534 = vshrl.u32 %v533, 7
        %v535 = vsub.s32 0, %v534
        %v536 = vrot.slane %v531, %v535
        %v554 = vunpack.c.l.b16 %v483
        %v555 = vunpack.c.h.b16 %v483
        %v556 = vunpack.c.l.b16 %v484
        %v557 = vunpack.c.h.b16 %v484
        %v558 = vunpack.c.l.b16 %v485
        %v559 = vunpack.c.h.b16 %v485
        %v560 = vunpack.c.l.b16 %v486
        %v561 = vunpack.c.h.b16 %v486
        %v562 = vunpack.c.l.b16 %v487
        %v563 = vunpack.c.h.b16 %v487
        %v564 = vunpack.c.l.b16 %v488
        %v565 = vunpack.c.h.b16 %v488
        %v566 = vunpack.c.l.b16 %v489
        %v567 = vunpack.c.h.b16 %v489
        %v568 = vunpack.c.l.b16 %v490
        %v569 = vunpack.c.h.b16 %v490
        %v570 = vunpack.c.l.b16 %v491
        %v571 = vunpack.c.h.b16 %v491
        %v572 = vunpack.c.l.b16 %v492
        %v573 = vunpack.c.h.b16 %v492
        %v574 = vunpack.c.l.b16 %v493
        %v575 = vunpack.c.h.b16 %v493
        %v576 = vunpack.c.l.b16 %v494
        %v577 = vunpack.c.h.b16 %v494
        %v578 = vunpack.c.l.b16 %v495
        %v579 = vunpack.c.h.b16 %v495
        %v580 = vunpack.c.l.b16 %v496
        %v581 = vunpack.c.h.b16 %v496
        %v582 = vunpack.c.l.b16 %v497
        %v583 = vunpack.c.h.b16 %v497
        %v584 = vunpack.c.l.b16 %v498
        %v585 = vunpack.c.h.b16 %v498
        %v586 = vpack.c.b16 %v556, %v554
        %v587 = vpack.c.b16 %v557, %v555
        %v588 = vpack.c.b16 %v560, %v558
        %v589 = vpack.c.b16 %v561, %v559
        %v590 = vpack.c.b16 %v564, %v562
        %v591 = vpack.c.b16 %v565, %v563
        %v592 = vpack.c.b16 %v568, %v566
        %v593 = vpack.c.b16 %v569, %v567
        %v594 = vpack.c.b16 %v572, %v570
        %v595 = vpack.c.b16 %v573, %v571
        %v596 = vpack.c.b16 %v576, %v574
        %v597 = vpack.c.b16 %v577, %v575
        %v598 = vpack.c.b16 %v580, %v578
        %v599 = vpack.c.b16 %v581, %v579
        %v600 = vpack.c.b16 %v584, %v582
        %v601 = vpack.c.b16 %v585, %v583
        %v650 = vunpack.c.l.b16 %v499
        %v651 = vunpack.c.l.b16 %v500
        %v652 = vunpack.c.l.b16 %v501
        %v653 = vunpack.c.l.b16 %v502
        %v654 = vunpack.c.l.b16 %v503
        %v655 = vunpack.c.l.b16 %v504
        %v656 = vunpack.c.l.b16 %v505
        %v657 = vunpack.c.l.b16 %v506
        %v658 = vunpack.c.l.b16 %v507
        %v659 = vunpack.c.l.b16 %v508
        %v660 = vunpack.c.l.b16 %v509
        %v661 = vunpack.c.l.b16 %v510
        %v662 = vunpack.c.l.b16 %v511
        %v663 = vunpack.c.l.b16 %v512
        %v664 = vunpack.c.l.b16 %v513
        %v665 = vunpack.c.l.b16 %v514
        %v666 = vunpack.c.l.b16 %v515
        %v667 = vunpack.c.l.b16 %v516
        %v668 = vunpack.c.l.b16 %v517
        %v669 = vunpack.c.l.b16 %v518
        %v670 = vunpack.c.l.b16 %v519
        %v671 = vunpack.c.l.b16 %v520
        %v672 = vunpack.c.l.b16 %v521
        %v673 = vunpack.c.l.b16 %v522
        %v674 = vunpack.c.l.b16 %v523
        %v675 = vunpack.c.l.b16 %v524
        %v676 = vunpack.c.l.b16 %v525
        %v677 = vunpack.c.l.b16 %v526
        %v678 = vunpack.c.l.b16 %v527
        %v679 = vunpack.c.l.b16 %v528
        %v680 = vunpack.c.l.b16 %v529
        %v681 = vunpack.c.l.b16 %v530
        %v682 = vpack.c.b16 %v651, %v650
        %v683 = vpack.c.b16 %v653, %v652
        %v684 = vpack.c.b16 %v655, %v654
        %v685 = vpack.c.b16 %v657, %v656
        %v686 = vpack.c.b16 %v659, %v658
        %v687 = vpack.c.b16 %v661, %v660
        %v688 = vpack.c.b16 %v663, %v662
        %v689 = vpack.c.b16 %v665, %v664
        %v690 = vpack.c.b16 %v667, %v666
        %v691 = vpack.c.b16 %v669, %v668
        %v692 = vpack.c.b16 %v671, %v670
        %v693 = vpack.c.b16 %v673, %v672
        %v694 = vpack.c.b16 %v675, %v674
        %v695 = vpack.c.b16 %v677, %v676
        %v696 = vpack.c.b16 %v679, %v678
        %v697 = vpack.c.b16 %v681, %v680
        %714 = vmatprep.subr.bf16.mxu0 0
        %715 = vmatpush1.bf16.msra.mxu0 %v682
        %716 = vmatprep.subr.bf16.mxu0 0
        %717 = vmatpush1.bf16.msra.mxu0 %v683
        %718 = vmatprep.subr.bf16.mxu0 0
        %719 = vmatpush1.bf16.msra.mxu0 %v684
        %720 = vmatprep.subr.bf16.mxu0 0
        %721 = vmatpush1.bf16.msra.mxu0 %v685
        %722 = vmatprep.subr.bf16.mxu0 0
        %723 = vmatpush1.bf16.msra.mxu0 %v686
        %724 = vmatprep.subr.bf16.mxu0 0
        %725 = vmatpush1.bf16.msra.mxu0 %v687
        %726 = vmatprep.subr.bf16.mxu0 0
        %727 = vmatpush1.bf16.msra.mxu0 %v688
        %728 = vmatprep.subr.bf16.mxu0 0
        %729 = vmatpush1.bf16.msra.mxu0 %v689
        %730 = vmatprep.subr.bf16.mxu0 0
        %731 = vmatpush1.bf16.msra.mxu0 %v690
        %732 = vmatprep.subr.bf16.mxu0 0
        %733 = vmatpush1.bf16.msra.mxu0 %v691
        %734 = vmatprep.subr.bf16.mxu0 0
        %735 = vmatpush1.bf16.msra.mxu0 %v692
        %736 = vmatprep.subr.bf16.mxu0 0
        %737 = vmatpush1.bf16.msra.mxu0 %v693
        %738 = vmatprep.subr.bf16.mxu0 0
        %739 = vmatpush1.bf16.msra.mxu0 %v694
        %740 = vmatprep.subr.bf16.mxu0 0
        %741 = vmatpush1.bf16.msra.mxu0 %v695
        %742 = vmatprep.subr.bf16.mxu0 0
        %743 = vmatpush1.bf16.msra.mxu0 %v696
        %744 = vmatprep.subr.bf16.mxu0 0
        %745 = vmatpush1.bf16.msra.mxu0 %v697
        %746 = vmatprep.mubr.bf16.mxu0 %v587
        %747 = vmatmul.mubr.bf16.gmra.mrb[0].mxu0 %v586
        %v748 = vpop.f32.mrb[0].mxu0
        %v749 = vadd.f32 %v536, %v748
        %v750 = vpop.f32.mrb[0].mxu0
        %v751 = vpop.f32.mrb[0].mxu0
        %v752 = vadd.f32 %v536, %v751
        %v753 = vpop.f32.mrb[0].mxu0
        %754 = vmatprep.mubr.bf16.mxu0 %v589
        %755 = vmatmul.mubr.bf16.gmra.mrb[0].mxu0 %v588
        %v756 = vpop.f32.mrb[0].mxu0
        %v757 = vadd.f32 %v536, %v756
        %v758 = vpop.f32.mrb[0].mxu0
        %v759 = vpop.f32.mrb[0].mxu0
        %v760 = vadd.f32 %v536, %v759
        %v761 = vpop.f32.mrb[0].mxu0
        %762 = vmatprep.mubr.bf16.mxu0 %v591
        %763 = vmatmul.mubr.bf16.gmra.mrb[0].mxu0 %v590
        %v764 = vpop.f32.mrb[0].mxu0
        %v765 = vadd.f32 %v536, %v764
        %v766 = vpop.f32.mrb[0].mxu0
        %v767 = vpop.f32.mrb[0].mxu0
        %v768 = vadd.f32 %v536, %v767
        %v769 = vpop.f32.mrb[0].mxu0
        %770 = vmatprep.mubr.bf16.mxu0 %v593
        %771 = vmatmul.mubr.bf16.gmra.mrb[0].mxu0 %v592
        %v772 = vpop.f32.mrb[0].mxu0
        %v773 = vadd.f32 %v536, %v772
        %v774 = vpop.f32.mrb[0].mxu0
        %v775 = vpop.f32.mrb[0].mxu0
        %v776 = vadd.f32 %v536, %v775
        %v777 = vpop.f32.mrb[0].mxu0
        %778 = vmatprep.mubr.bf16.mxu0 %v595
        %779 = vmatmul.mubr.bf16.gmra.mrb[0].mxu0 %v594
        %v780 = vpop.f32.mrb[0].mxu0
        %v781 = vadd.f32 %v536, %v780
        %v782 = vpop.f32.mrb[0].mxu0
        %v783 = vpop.f32.mrb[0].mxu0
        %v784 = vadd.f32 %v536, %v783
        %v785 = vpop.f32.mrb[0].mxu0
        %786 = vmatprep.mubr.bf16.mxu0 %v597
        %787 = vmatmul.mubr.bf16.gmra.mrb[0].mxu0 %v596
        %v788 = vpop.f32.mrb[0].mxu0
        %v789 = vadd.f32 %v536, %v788
        %v790 = vpop.f32.mrb[0].mxu0
        %v791 = vpop.f32.mrb[0].mxu0
        %v792 = vadd.f32 %v536, %v791
        %v793 = vpop.f32.mrb[0].mxu0
        %794 = vmatprep.mubr.bf16.mxu0 %v599
        %795 = vmatmul.mubr.bf16.gmra.mrb[0].mxu0 %v598
        %v796 = vpop.f32.mrb[0].mxu0
        %v797 = vadd.f32 %v536, %v796
        %v798 = vpop.f32.mrb[0].mxu0
        %v799 = vpop.f32.mrb[0].mxu0
        %v800 = vadd.f32 %v536, %v799
        %v801 = vpop.f32.mrb[0].mxu0
        %802 = vmatprep.mubr.bf16.mxu0 %v601
        %803 = vmatmul.mubr.bf16.gmra.mrb[0].mxu0 %v600
        %v804 = vpop.f32.mrb[0].mxu0
        %v805 = vadd.f32 %v536, %v804
        %v806 = vpop.f32.mrb[0].mxu0
        %v807 = vpop.f32.mrb[0].mxu0
        %v808 = vadd.f32 %v536, %v807
        %v809 = vpop.f32.mrb[0].mxu0
        %810 = vdwg.mxu0
        %v811 = vmax.f32 %v749, 0.0
        %v812 = vmax.f32 %v752, 0.0
        %v813 = vmax.f32 %v757, 0.0
        %v814 = vmax.f32 %v760, 0.0
        %v815 = vmax.f32 %v765, 0.0
        %v816 = vmax.f32 %v768, 0.0
        %v817 = vmax.f32 %v773, 0.0
        %v818 = vmax.f32 %v776, 0.0
        %v819 = vmax.f32 %v781, 0.0
        %v820 = vmax.f32 %v784, 0.0
        %v821 = vmax.f32 %v789, 0.0
        %v822 = vmax.f32 %v792, 0.0
        %v823 = vmax.f32 %v797, 0.0
        %v824 = vmax.f32 %v800, 0.0
        %v825 = vmax.f32 %v805, 0.0
        %v826 = vmax.f32 %v808, 0.0
        %v827 = vpack.c.bf16 %v812, %v811
        %v828 = vpack.c.bf16 %v814, %v813
        %v829 = vpack.c.bf16 %v816, %v815
        %v830 = vpack.c.bf16 %v818, %v817
        %v831 = vpack.c.bf16 %v820, %v819
        %v832 = vpack.c.bf16 %v822, %v821
        %v833 = vpack.c.bf16 %v824, %v823
        %v834 = vpack.c.bf16 %v826, %v825
        %v835 = vld [vmem:[#allocation10] sm:$0xff]
        %v836 = vld [vmem:[#allocation10 + $0x8] sm:$0xff]
        %v837 = vld [vmem:[#allocation10 + $0x10] sm:$0xff]
        %v838 = vld [vmem:[#allocation10 + $0x18] sm:$0xff]
        %v839 = vld [vmem:[#allocation10 + $0x20] sm:$0xff]
        %v840 = vld [vmem:[#allocation10 + $0x28] sm:$0xff]
        %v841 = vld [vmem:[#allocation10 + $0x30] sm:$0xff]
        %v842 = vld [vmem:[#allocation10 + $0x38] sm:$0xff]
        %v843 = vld [vmem:[#allocation10 + $0x40] sm:$0xff]
        %v844 = vld [vmem:[#allocation10 + $0x48] sm:$0xff]
        %v845 = vld [vmem:[#allocation10 + $0x50] sm:$0xff]
        %v846 = vld [vmem:[#allocation10 + $0x58] sm:$0xff]
        %v847 = vld [vmem:[#allocation10 + $0x60] sm:$0xff]
        %v848 = vld [vmem:[#allocation10 + $0x68] sm:$0xff]
        %v849 = vld [vmem:[#allocation10 + $0x70] sm:$0xff]
        %v850 = vld [vmem:[#allocation10 + $0x78] sm:$0xff]
        %v851 = vld [vmem:[%s4] sm:$0x3]
        %v853 = vlaneseq
        %v854 = vshrl.u32 %v853, 7
        %v855 = vsub.s32 0, %v854
        %v856 = vrot.slane %v851, %v855
        %v857 = vlaneseq
        %v858 = vshrl.u32 %v857, 7
        %v859 = vsub.s32 1, %v858
        %v860 = vrot.slane %v851, %v859
        %v879 = vunpack.c.l.b16 %v835
        %v880 = vunpack.c.h.b16 %v835
        %v881 = vunpack.c.l.b16 %v836
        %v882 = vunpack.c.h.b16 %v836
        %v883 = vunpack.c.l.b16 %v837
        %v884 = vunpack.c.h.b16 %v837
        %v885 = vunpack.c.l.b16 %v838
        %v886 = vunpack.c.h.b16 %v838
        %v887 = vunpack.c.l.b16 %v839
        %v888 = vunpack.c.h.b16 %v839
        %v889 = vunpack.c.l.b16 %v840
        %v890 = vunpack.c.h.b16 %v840
        %v891 = vunpack.c.l.b16 %v841
        %v892 = vunpack.c.h.b16 %v841
        %v893 = vunpack.c.l.b16 %v842
        %v894 = vunpack.c.h.b16 %v842
        %v895 = vunpack.c.l.b16 %v843
        %v896 = vunpack.c.h.b16 %v843
        %v897 = vunpack.c.l.b16 %v844
        %v898 = vunpack.c.h.b16 %v844
        %v899 = vunpack.c.l.b16 %v845
        %v900 = vunpack.c.h.b16 %v845
        %v901 = vunpack.c.l.b16 %v846
        %v902 = vunpack.c.h.b16 %v846
        %v903 = vunpack.c.l.b16 %v847
        %v904 = vunpack.c.h.b16 %v847
        %v905 = vunpack.c.l.b16 %v848
        %v906 = vunpack.c.h.b16 %v848
        %v907 = vunpack.c.l.b16 %v849
        %v908 = vunpack.c.h.b16 %v849
        %v909 = vunpack.c.l.b16 %v850
        %v910 = vunpack.c.h.b16 %v850
        %v911 = vpack.c.b16 %v881, %v879
        %v912 = vpack.c.b16 %v882, %v880
        %v913 = vpack.c.b16 %v885, %v883
        %v914 = vpack.c.b16 %v886, %v884
        %v915 = vpack.c.b16 %v889, %v887
        %v916 = vpack.c.b16 %v890, %v888
        %v917 = vpack.c.b16 %v893, %v891
        %v918 = vpack.c.b16 %v894, %v892
        %v919 = vpack.c.b16 %v897, %v895
        %v920 = vpack.c.b16 %v898, %v896
        %v921 = vpack.c.b16 %v901, %v899
        %v922 = vpack.c.b16 %v902, %v900
        %v923 = vpack.c.b16 %v905, %v903
        %v924 = vpack.c.b16 %v906, %v904
        %v925 = vpack.c.b16 %v909, %v907
        %v926 = vpack.c.b16 %v910, %v908
        %943 = vmatprep.subr.bf16.mxu0 %v912
        %944 = vmatpush1.bf16.msra.mxu0 %v911
        %945 = vmatprep.subr.bf16.mxu0 %v914
        %946 = vmatpush1.bf16.msra.mxu0 %v913
        %947 = vmatprep.subr.bf16.mxu0 %v916
        %948 = vmatpush1.bf16.msra.mxu0 %v915
        %949 = vmatprep.subr.bf16.mxu0 %v918
        %950 = vmatpush1.bf16.msra.mxu0 %v917
        %951 = vmatprep.subr.bf16.mxu0 %v920
        %952 = vmatpush1.bf16.msra.mxu0 %v919
        %953 = vmatprep.subr.bf16.mxu0 %v922
        %954 = vmatpush1.bf16.msra.mxu0 %v921
        %955 = vmatprep.subr.bf16.mxu0 %v924
        %956 = vmatpush1.bf16.msra.mxu0 %v923
        %957 = vmatprep.subr.bf16.mxu0 %v926
        %958 = vmatpush1.bf16.msra.mxu0 %v925
        %959 = vmatprep.subr.bf16.mxu0 0
        %960 = vmatpush1.bf16.msra.mxu0 0
        %961 = vmatprep.subr.bf16.mxu0 0
        %962 = vmatpush1.bf16.msra.mxu0 0
        %963 = vmatprep.subr.bf16.mxu0 0
        %964 = vmatpush1.bf16.msra.mxu0 0
        %965 = vmatprep.subr.bf16.mxu0 0
        %966 = vmatpush1.bf16.msra.mxu0 0
        %967 = vmatprep.subr.bf16.mxu0 0
        %968 = vmatpush1.bf16.msra.mxu0 0
        %969 = vmatprep.subr.bf16.mxu0 0
        %970 = vmatpush1.bf16.msra.mxu0 0
        %971 = vmatprep.subr.bf16.mxu0 0
        %972 = vmatpush1.bf16.msra.mxu0 0
        %973 = vmatprep.subr.bf16.mxu0 0
        %974 = vmatpush1.bf16.msra.mxu0 0
        %975 = vmatprep.mubr.bf16.mxu0 0
        %976 = vmatmul.mubr.bf16.gmra.mrb[0].mxu0 %v827
        %v977 = vpop.f32.mrb[0].mxu0
        %v978 = vadd.f32 %v856, %v977
        %v979 = vpop.f32.mrb[0].mxu0
        %v980 = vadd.f32 %v860, %v979
        %v981 = vpop.f32.mrb[0].mxu0
        %v982 = vadd.f32 %v856, %v981
        %v983 = vpop.f32.mrb[0].mxu0
        %v984 = vadd.f32 %v860, %v983
        %985 = vmatprep.mubr.bf16.mxu0 0
        %986 = vmatmul.mubr.bf16.gmra.mrb[0].mxu0 %v828
        %v987 = vpop.f32.mrb[0].mxu0
        %v988 = vadd.f32 %v856, %v987
        %v989 = vpop.f32.mrb[0].mxu0
        %v990 = vadd.f32 %v860, %v989
        %v991 = vpop.f32.mrb[0].mxu0
        %v992 = vadd.f32 %v856, %v991
        %v993 = vpop.f32.mrb[0].mxu0
        %v994 = vadd.f32 %v860, %v993
        %995 = vmatprep.mubr.bf16.mxu0 0
        %996 = vmatmul.mubr.bf16.gmra.mrb[0].mxu0 %v829
        %v997 = vpop.f32.mrb[0].mxu0
        %v998 = vadd.f32 %v856, %v997
        %v999 = vpop.f32.mrb[0].mxu0
        %v1000 = vadd.f32 %v860, %v999
        %v1001 = vpop.f32.mrb[0].mxu0
        %v1002 = vadd.f32 %v856, %v1001
        %v1003 = vpop.f32.mrb[0].mxu0
        %v1004 = vadd.f32 %v860, %v1003
        %1005 = vmatprep.mubr.bf16.mxu0 0
        %1006 = vmatmul.mubr.bf16.gmra.mrb[0].mxu0 %v830
        %v1007 = vpop.f32.mrb[0].mxu0
        %v1008 = vadd.f32 %v856, %v1007
        %v1009 = vpop.f32.mrb[0].mxu0
        %v1010 = vadd.f32 %v860, %v1009
        %v1011 = vpop.f32.mrb[0].mxu0
        %v1012 = vadd.f32 %v856, %v1011
        %v1013 = vpop.f32.mrb[0].mxu0
        %v1014 = vadd.f32 %v860, %v1013
        %1015 = vmatprep.mubr.bf16.mxu0 0
        %1016 = vmatmul.mubr.bf16.gmra.mrb[0].mxu0 %v831
        %v1017 = vpop.f32.mrb[0].mxu0
        %v1018 = vadd.f32 %v856, %v1017
        %v1019 = vpop.f32.mrb[0].mxu0
        %v1020 = vadd.f32 %v860, %v1019
        %v1021 = vpop.f32.mrb[0].mxu0
        %v1022 = vadd.f32 %v856, %v1021
        %v1023 = vpop.f32.mrb[0].mxu0
        %v1024 = vadd.f32 %v860, %v1023
        %1025 = vmatprep.mubr.bf16.mxu0 0
        %1026 = vmatmul.mubr.bf16.gmra.mrb[0].mxu0 %v832
        %v1027 = vpop.f32.mrb[0].mxu0
        %v1028 = vadd.f32 %v856, %v1027
        %v1029 = vpop.f32.mrb[0].mxu0
        %v1030 = vadd.f32 %v860, %v1029
        %v1031 = vpop.f32.mrb[0].mxu0
        %v1032 = vadd.f32 %v856, %v1031
        %v1033 = vpop.f32.mrb[0].mxu0
        %v1034 = vadd.f32 %v860, %v1033
        %1035 = vmatprep.mubr.bf16.mxu0 0
        %1036 = vmatmul.mubr.bf16.gmra.mrb[0].mxu0 %v833
        %v1037 = vpop.f32.mrb[0].mxu0
        %v1038 = vadd.f32 %v856, %v1037
        %v1039 = vpop.f32.mrb[0].mxu0
        %v1040 = vadd.f32 %v860, %v1039
        %v1041 = vpop.f32.mrb[0].mxu0
        %v1042 = vadd.f32 %v856, %v1041
        %v1043 = vpop.f32.mrb[0].mxu0
        %v1044 = vadd.f32 %v860, %v1043
        %1045 = vmatprep.mubr.bf16.mxu0 0
        %1046 = vmatmul.mubr.bf16.gmra.mrb[0].mxu0 %v834
        %v1047 = vpop.f32.mrb[0].mxu0
        %v1048 = vadd.f32 %v856, %v1047
        %v1049 = vpop.f32.mrb[0].mxu0
        %v1050 = vadd.f32 %v860, %v1049
        %v1051 = vpop.f32.mrb[0].mxu0
        %v1052 = vadd.f32 %v856, %v1051
        %v1053 = vpop.f32.mrb[0].mxu0
        %v1054 = vadd.f32 %v860, %v1053
        %1055 = vdwg.mxu0
        %v1056 = vtanh.pop %v978
        %v1057 = vtanh.pop %v982
        %v1058 = vtanh.pop %v988
        %v1059 = vtanh.pop %v992
        %v1060 = vtanh.pop %v998
        %v1061 = vtanh.pop %v1002
        %v1062 = vtanh.pop %v1008
        %v1063 = vtanh.pop %v1012
        %v1064 = vtanh.pop %v1018
        %v1065 = vtanh.pop %v1022
        %v1066 = vtanh.pop %v1028
        %v1067 = vtanh.pop %v1032
        %v1068 = vtanh.pop %v1038
        %v1069 = vtanh.pop %v1042
        %v1070 = vtanh.pop %v1048
        %v1071 = vtanh.pop %v1052
        %v1072 = vxor.u32 %v980, 2147483648
        %v1073 = vxor.u32 %v984, 2147483648
        %v1074 = vxor.u32 %v990, 2147483648
        %v1075 = vxor.u32 %v994, 2147483648
        %v1076 = vxor.u32 %v1000, 2147483648
        %v1077 = vxor.u32 %v1004, 2147483648
        %v1078 = vxor.u32 %v1010, 2147483648
        %v1079 = vxor.u32 %v1014, 2147483648
        %v1080 = vxor.u32 %v1020, 2147483648
        %v1081 = vxor.u32 %v1024, 2147483648
        %v1082 = vxor.u32 %v1030, 2147483648
        %v1083 = vxor.u32 %v1034, 2147483648
        %v1084 = vxor.u32 %v1040, 2147483648
        %v1085 = vxor.u32 %v1044, 2147483648
        %v1086 = vxor.u32 %v1050, 2147483648
        %v1087 = vxor.u32 %v1054, 2147483648
        %v1088 = vmul.f32 %v1072, 1.442695
        %v1089 = vpow.pop %v1088
        %v1090 = vmul.f32 %v1073, 1.442695
        %v1091 = vpow.pop %v1090
        %v1092 = vmul.f32 %v1074, 1.442695
        %v1093 = vpow.pop %v1092
        %v1094 = vmul.f32 %v1075, 1.442695
        %v1095 = vpow.pop %v1094
        %v1096 = vmul.f32 %v1076, 1.442695
        %v1097 = vpow.pop %v1096
        %v1098 = vmul.f32 %v1077, 1.442695
        %v1099 = vpow.pop %v1098
        %v1100 = vmul.f32 %v1078, 1.442695
        %v1101 = vpow.pop %v1100
        %v1102 = vmul.f32 %v1079, 1.442695
        %v1103 = vpow.pop %v1102
        %v1104 = vmul.f32 %v1080, 1.442695
        %v1105 = vpow.pop %v1104
        %v1106 = vmul.f32 %v1081, 1.442695
        %v1107 = vpow.pop %v1106
        %v1108 = vmul.f32 %v1082, 1.442695
        %v1109 = vpow.pop %v1108
        %v1110 = vmul.f32 %v1083, 1.442695
        %v1111 = vpow.pop %v1110
        %v1112 = vmul.f32 %v1084, 1.442695
        %v1113 = vpow.pop %v1112
        %v1114 = vmul.f32 %v1085, 1.442695
        %v1115 = vpow.pop %v1114
        %v1116 = vmul.f32 %v1086, 1.442695
        %v1117 = vpow.pop %v1116
        %v1118 = vmul.f32 %v1087, 1.442695
        %v1119 = vpow.pop %v1118
        %v1120 = vadd.f32 %v1089, 1.0
        %v1121 = vadd.f32 %v1091, 1.0
        %v1122 = vadd.f32 %v1093, 1.0
        %v1123 = vadd.f32 %v1095, 1.0
        %v1124 = vadd.f32 %v1097, 1.0
        %v1125 = vadd.f32 %v1099, 1.0
        %v1126 = vadd.f32 %v1101, 1.0
        %v1127 = vadd.f32 %v1103, 1.0
        %v1128 = vadd.f32 %v1105, 1.0
        %v1129 = vadd.f32 %v1107, 1.0
        %v1130 = vadd.f32 %v1109, 1.0
        %v1131 = vadd.f32 %v1111, 1.0
        %v1132 = vadd.f32 %v1113, 1.0
        %v1133 = vadd.f32 %v1115, 1.0
        %v1134 = vadd.f32 %v1117, 1.0
        %v1135 = vadd.f32 %v1119, 1.0
        %v1136 = vrcp.pop %v1120
        %v1137 = vmul.f32 1.0, %v1136
        %v1138 = vrcp.pop %v1121
        %v1139 = vmul.f32 1.0, %v1138
        %v1140 = vrcp.pop %v1122
        %v1141 = vmul.f32 1.0, %v1140
        %v1142 = vrcp.pop %v1123
        %v1143 = vmul.f32 1.0, %v1142
        %v1144 = vrcp.pop %v1124
        %v1145 = vmul.f32 1.0, %v1144
        %v1146 = vrcp.pop %v1125
        %v1147 = vmul.f32 1.0, %v1146
        %v1148 = vrcp.pop %v1126
        %v1149 = vmul.f32 1.0, %v1148
        %v1150 = vrcp.pop %v1127
        %v1151 = vmul.f32 1.0, %v1150
        %v1152 = vrcp.pop %v1128
        %v1153 = vmul.f32 1.0, %v1152
        %v1154 = vrcp.pop %v1129
        %v1155 = vmul.f32 1.0, %v1154
        %v1156 = vrcp.pop %v1130
        %v1157 = vmul.f32 1.0, %v1156
        %v1158 = vrcp.pop %v1131
        %v1159 = vmul.f32 1.0, %v1158
        %v1160 = vrcp.pop %v1132
        %v1161 = vmul.f32 1.0, %v1160
        %v1162 = vrcp.pop %v1133
        %v1163 = vmul.f32 1.0, %v1162
        %v1164 = vrcp.pop %v1134
        %v1165 = vmul.f32 1.0, %v1164
        %v1166 = vrcp.pop %v1135
        %v1167 = vmul.f32 1.0, %v1166
        %v1168 = vmul.f32 %v1056, %v1137
        %v1169 = vmul.f32 %v1057, %v1139
        %v1170 = vmul.f32 %v1058, %v1141
        %v1171 = vmul.f32 %v1059, %v1143
        %v1172 = vmul.f32 %v1060, %v1145
        %v1173 = vmul.f32 %v1061, %v1147
        %v1174 = vmul.f32 %v1062, %v1149
        %v1175 = vmul.f32 %v1063, %v1151
        %v1176 = vmul.f32 %v1064, %v1153
        %v1177 = vmul.f32 %v1065, %v1155
        %v1178 = vmul.f32 %v1066, %v1157
        %v1179 = vmul.f32 %v1067, %v1159
        %v1180 = vmul.f32 %v1068, %v1161
        %v1181 = vmul.f32 %v1069, %v1163
        %v1182 = vmul.f32 %v1070, %v1165
        %v1183 = vmul.f32 %v1071, %v1167
        %v1184 = vld [vmem:[%s5] sm:$0x3]
        %v1185 = vld [vmem:[%s6] sm:$0x3]
        %1187 = vset.pattern.permute.xlu0 0
        %1188 = vperm.xlu0 %1187, %v1185
        %v1189 = vpop.permute.xlu0 %1188
        %1191 = vmatprep.subr.mxu0 0.0
        %1192 = vmatpush1.xpose.msra.mxu0 %v1168
        %1193 = vmatprep.subr.mxu0 0.0
        %1194 = vmatpush1.xpose.msra.mxu0 %v1169
        %1195 = vmatprep.subr.mxu0 0.0
        %1196 = vmatpush1.xpose.msra.mxu0 %v1170
        %1197 = vmatprep.subr.mxu0 0.0
        %1198 = vmatpush1.xpose.msra.mxu0 %v1171
        %1199 = vmatprep.subr.mxu0 0.0
        %1200 = vmatpush1.xpose.msra.mxu0 %v1172
        %1201 = vmatprep.subr.mxu0 0.0
        %1202 = vmatpush1.xpose.msra.mxu0 %v1173
        %1203 = vmatprep.subr.mxu0 0.0
        %1204 = vmatpush1.xpose.msra.mxu0 %v1174
        %1205 = vmatprep.subr.mxu0 0.0
        %1206 = vmatpush1.xpose.msra.mxu0 %v1175
        %1207 = vmatprep.subr.mxu0 0.0
        %1208 = vmatpush1.xpose.msra.mxu0 %v1176
        %1209 = vmatprep.subr.mxu0 0.0
        %1210 = vmatpush1.xpose.msra.mxu0 %v1177
        %1211 = vmatprep.subr.mxu0 0.0
        %1212 = vmatpush1.xpose.msra.mxu0 %v1178
        %1213 = vmatprep.subr.mxu0 0.0
        %1214 = vmatpush1.xpose.msra.mxu0 %v1179
        %1215 = vmatprep.subr.mxu0 0.0
        %1216 = vmatpush1.xpose.msra.mxu0 %v1180
        %1217 = vmatprep.subr.mxu0 0.0
        %1218 = vmatpush1.xpose.msra.mxu0 %v1181
        %1219 = vmatprep.subr.mxu0 0.0
        %1220 = vmatpush1.xpose.msra.mxu0 %v1182
        %1221 = vmatprep.subr.mxu0 0.0
        %1222 = vmatpush1.xpose.msra.mxu0 %v1183
        %1223 = vmatprep.subr.mxu0 0.0
        %1224 = vmatpush1.xpose.msra.mxu0 0.0
        %1225 = vmatprep.subr.mxu0 0.0
        %1226 = vmatpush1.xpose.msra.mxu0 0.0
        %1227 = vmatprep.subr.mxu0 0.0
        %1228 = vmatpush1.xpose.msra.mxu0 0.0
        %1229 = vmatprep.subr.mxu0 0.0
        %1230 = vmatpush1.xpose.msra.mxu0 0.0
        %1231 = vmatprep.subr.mxu0 0.0
        %1232 = vmatpush1.xpose.msra.mxu0 0.0
        %1233 = vmatprep.subr.mxu0 0.0
        %1234 = vmatpush1.xpose.msra.mxu0 0.0
        %1235 = vmatprep.subr.mxu0 0.0
        %1236 = vmatpush1.xpose.msra.mxu0 0.0
        %1237 = vmatprep.subr.mxu0 0.0
        %1238 = vmatpush1.xpose.msra.mxu0 0.0
        %1239 = vmatprep.subr.mxu0 0.0
        %1240 = vmatpush1.xpose.msra.mxu0 0.0
        %1241 = vmatprep.subr.mxu0 0.0
        %1242 = vmatpush1.xpose.msra.mxu0 0.0
        %1243 = vmatprep.subr.mxu0 0.0
        %1244 = vmatpush1.xpose.msra.mxu0 0.0
        %1245 = vmatprep.subr.mxu0 0.0
        %1246 = vmatpush1.xpose.msra.mxu0 0.0
        %1247 = vmatprep.subr.mxu0 0.0
        %1248 = vmatpush1.xpose.msra.mxu0 0.0
        %1249 = vmatprep.subr.mxu0 0.0
        %1250 = vmatpush1.xpose.msra.mxu0 0.0
        %1251 = vmatprep.subr.mxu0 0.0
        %1252 = vmatpush1.xpose.msra.mxu0 0.0
        %1253 = vmatprep.subr.mxu0 0.0
        %1254 = vmatpush1.xpose.msra.mxu0 0.0
        %1255 = vmatprep.mubr.f32.mxu0 0.0
        %1256 = vmatmul.mubr.f32.gmra.mrb[0].mxu0 %v1184
        %v1257 = vpop.f32.mrb[0].mxu0
        %v1258 = vadd.f32 %v1189, %v1257
        %v1259 = vpop.f32.mrb[0].mxu0
        %1260 = vdwg.mxu0
        %v1261 = vsel %vm482, 1, 0
        %vm1262 = vcmp.eq.s32.totalorder %v1261, 1
        %v1263 = vsel %vm1262, %v1258, 0.0
        %1264 = vst [vmem:[%s452] sm:$0x3] %v1263
        %v1265 = vsel %vm1262, %v1258, -1e+30
        %v1266 = vld [vmem:[#allocation2] sm:$0x3]
        %vm1267 = vcmask 1041408
        %v1268 = vsel %vm1267, %v1265, -inf
        %1269 = vmax.xlane.f32.xlu0 %v1268
        %v1270 = vpop.xlane.xlu0 %1269
        %v1271 = vmax.f32 %v1266, %v1270
        %v1272 = vsub.f32 %v1266, %v1271
        %v1273 = vmul.f32 %v1272, 1.442695
        %v1274 = vpow.pop %v1273
        %1276 = vset.pattern.permute.xlu0 0
        %1277 = vperm.xlu0 %1276, %v1271
        %v1278 = vpop.permute.xlu0 %1277
        %v1280 = vsub.f32 %v1265, %v1278
        %v1281 = vmul.f32 %v1280, 1.442695
        %v1282 = vpow.pop %v1281
        %v1283 = vld [vmem:[#allocation3] sm:$0x3]
        %v1284 = vmul.f32 %v1274, %v1283
        %v1285 = vsel %vm1267, %v1282, 0.0
        %1286 = vadd.xlane.f32.xlu0 %v1285
        %v1287 = vpop.xlane.xlu0 %1286
        %v1288 = vadd.f32 %v1284, %v1287
        %vm1289 = vcmask 1024
        %1290 = vst.msk [vmem:[#allocation3] sm:$0x3] %vm1289, %v1288
        %v1291 = vld [vmem:[#allocation4] sm:$0x3]
        %1293 = vset.pattern.permute.xlu0 0
        %1294 = vperm.xlu0 %1293, %v1274
        %v1295 = vpop.permute.xlu0 %1294
        %v1297 = vmul.f32 %v1295, %v1291
        %v1298 = vpack.c.bf16 %v1282, %v1282
        %1299 = vmatprep.subr.bf16.mxu0 0
        %1300 = vmatpush1.bf16.msra.mxu0 %v827
        %1301 = vmatprep.subr.bf16.mxu0 0
        %1302 = vmatpush1.bf16.msra.mxu0 %v828
        %1303 = vmatprep.subr.bf16.mxu0 0
        %1304 = vmatpush1.bf16.msra.mxu0 %v829
        %1305 = vmatprep.subr.bf16.mxu0 0
        %1306 = vmatpush1.bf16.msra.mxu0 %v830
        %1307 = vmatprep.subr.bf16.mxu0 0
        %1308 = vmatpush1.bf16.msra.mxu0 %v831
        %1309 = vmatprep.subr.bf16.mxu0 0
        %1310 = vmatpush1.bf16.msra.mxu0 %v832
        %1311 = vmatprep.subr.bf16.mxu0 0
        %1312 = vmatpush1.bf16.msra.mxu0 %v833
        %1313 = vmatprep.subr.bf16.mxu0 0
        %1314 = vmatpush1.bf16.msra.mxu0 %v834
        %1315 = vmatprep.subr.bf16.mxu0 0
        %1316 = vmatpush1.bf16.msra.mxu0 0
        %1317 = vmatprep.subr.bf16.mxu0 0
        %1318 = vmatpush1.bf16.msra.mxu0 0
        %1319 = vmatprep.subr.bf16.mxu0 0
        %1320 = vmatpush1.bf16.msra.mxu0 0
        %1321 = vmatprep.subr.bf16.mxu0 0
        %1322 = vmatpush1.bf16.msra.mxu0 0
        %1323 = vmatprep.subr.bf16.mxu0 0
        %1324 = vmatpush1.bf16.msra.mxu0 0
        %1325 = vmatprep.subr.bf16.mxu0 0
        %1326 = vmatpush1.bf16.msra.mxu0 0
        %1327 = vmatprep.subr.bf16.mxu0 0
        %1328 = vmatpush1.bf16.msra.mxu0 0
        %1329 = vmatprep.subr.bf16.mxu0 0
        %1330 = vmatpush1.bf16.msra.mxu0 0
        %1331 = vmatprep.mubr.bf16.mxu0 0
        %1332 = vmatmul.mubr.bf16.gmra.mrb[0].mxu0 %v1298
        %v1333 = vpop.f32.mrb[0].mxu0
        %v1334 = vadd.f32 0.0, %v1333
        %v1335 = vpop.f32.mrb[0].mxu0
        %v1336 = vpop.f32.mrb[0].mxu0
        %v1337 = vpop.f32.mrb[0].mxu0
        %1338 = vdwg.mxu0
        %v1339 = vadd.f32 %v1297, %v1334
        %1340 = vst [vmem:[#allocation4] sm:$0x3] %v1339
        %1341 = vst.msk [vmem:[#allocation2] sm:$0x3] %vm1289, %v1271
        %p1342 = scmp.eq.s32.totalorder %s37, 1
        // Predicated region
        $region65: #{tpu_custom_call.1} parent=47 // pred_check
          %p1343 = pneg %p1342
        $region66: #{tpu_custom_call.1} parent=47 // pred_check_branch
          %1345 = sbr.rel (%p1343) target = $region68
        $region67: #{tpu_custom_call.1} parent=47 // pred_region
          %v1346 = vld [vmem:[#allocation2] sm:$0x3]
          %1347 = vst.msk [vmem:[%s459] sm:$0x3] %vm1289, %v1346
          %v1348 = vld [vmem:[#allocation3] sm:$0x3]
          %1349 = vst.msk [vmem:[%s463] sm:$0x3] %vm1289, %v1348
          %v1350 = vld [vmem:[#allocation4] sm:$0x3]
          %1351 = vst [vmem:[%s445] sm:$0x3] %v1350
        $region68: #{tpu_custom_call.1} parent=47 // pred_fallthru
          _
        %p1352 = scmp.lt.s32.totalorder %s36, 1
        %s1353 = scalar_select %p1352, %s36, 1
        %s1354 = smul.addr %s1353, 2
        %s1355 = scalar_lea.vmem %s7, %s1354
        %p1356 = scmp.lt.s32.totalorder %s36, 1
        %s1357 = scalar_select %p1356, %s36, 1
        %s1358 = smul.addr %s1357, 2
        %s1359 = scalar_lea.vmem %s8, %s1358
        %s1360 = sand.u32 %s260, 1
        %s1361 = scalar_lea.sflag [#allocation7], %s1360
        %s1362 = sand.u32 %s260, 1
        %s1363 = smul.addr %s1362, 2
        %s1364 = scalar_lea.vmem [#allocation11], %s1363
        %s1365 = sand.u32 %s290, 1
        %s1366 = scalar_lea.sflag [#allocation13], %s1365
        %s1367 = sand.u32 %s290, 1
        %s1368 = smul.addr %s1367, 2
        %s1369 = scalar_lea.vmem [#allocation12], %s1368
        // Predicated region
        $region69: #{tpu_custom_call.1} parent=47 // pred_check
          %p1370 = pneg %p218
        $region70: #{tpu_custom_call.1} parent=47 // pred_check_branch
          %1372 = sbr.rel (%p1370) target = $region72
        $region71: #{tpu_custom_call.1} parent=47 // pred_region
          _
        $region72: #{tpu_custom_call.1} parent=47 // pred_fallthru
          _
        // Predicated region
        $region73: #{tpu_custom_call.1} parent=47 // pred_check
          %p1373 = pneg %p244
        $region74: #{tpu_custom_call.1} parent=47 // pred_check_branch
          %1375 = sbr.rel (%p1373) target = $region76
        $region75: #{tpu_custom_call.1} parent=47 // pred_region
          _
        $region76: #{tpu_custom_call.1} parent=47 // pred_fallthru
          _
        // Predicated region
        $region77: #{tpu_custom_call.1} parent=47 // pred_check
          %p1376 = pneg %p270
        $region78: #{tpu_custom_call.1} parent=47 // pred_check_branch
          %1378 = sbr.rel (%p1376) target = $region80
        $region79: #{tpu_custom_call.1} parent=47 // pred_region
          %s1380 = ssub.s32 32, 32
          %1381 = vsyncadd %s1361, %s1380
          %s1382 = smul.addr %s36, 32
          %s1383 = scalar_lea.hbm %s9, %s1382
          %s1385 = sshll.u32 %s1364, 4
          %s1386 = int_to_ptr.vmem [resolvable:$true] %s1385
          %1388 = dma.vmem_to_hbm [thread:$0]  %s1386, 32, %s1383, %s1361
        $region80: #{tpu_custom_call.1} parent=47 // pred_fallthru
          _
        // Predicated region
        $region81: #{tpu_custom_call.1} parent=47 // pred_check
          %p1389 = pneg %p300
        $region82: #{tpu_custom_call.1} parent=47 // pred_check_branch
          %1391 = sbr.rel (%p1389) target = $region84
        $region83: #{tpu_custom_call.1} parent=47 // pred_region
          %s1392 = smul.u32 %s36, 2
          %s1393 = sadd.s32 %s1392, %s37
          %s1395 = ssub.s32 32, 32
          %1396 = vsyncadd %s1366, %s1395
          %s1397 = smul.addr %s1393, 32
          %s1398 = scalar_lea.hbm %s10, %s1397
          %s1400 = sshll.u32 %s1369, 4
          %s1401 = int_to_ptr.vmem [resolvable:$true] %s1400
          %1403 = dma.vmem_to_hbm [thread:$0]  %s1401, 32, %s1398, %s1366
        $region84: #{tpu_custom_call.1} parent=47 // pred_fallthru
          _
      $region48: #{tpu_custom_call.1} parent=5 // pred_fallthru
        _
      %p1404 = scmp.le.s32.totalorder 2, %s27
      // Predicated region
      $region85: #{tpu_custom_call.1} parent=5 // pred_check
        %p1405 = pneg %p1404
      $region86: #{tpu_custom_call.1} parent=5 // pred_check_branch
        %1407 = sbr.rel (%p1405) target = $region88
      $region87: #{tpu_custom_call.1} parent=5 // pred_region
        %s1408 = ssub.s32 %s27, 2
        // Predicated region
        $region89: #{tpu_custom_call.1} parent=87 // pred_check
          %p1409 = pneg %p224
        $region90: #{tpu_custom_call.1} parent=87 // pred_check_branch
          %1411 = sbr.rel (%p1409) target = $region92
        $region91: #{tpu_custom_call.1} parent=87 // pred_region
          %p1412 = scmp.lt.s32.totalorder %s38, 1
          %s1413 = scalar_select %p1412, %s38, 1
          %s1414 = smul.addr %s1413, 2
          %s1415 = scalar_lea.vmem %s7, %s1414
        $region92: #{tpu_custom_call.1} parent=87 // pred_fallthru
          _
        // Predicated region
        $region93: #{tpu_custom_call.1} parent=87 // pred_check
          %p1416 = pneg %p250
        $region94: #{tpu_custom_call.1} parent=87 // pred_check_branch
          %1418 = sbr.rel (%p1416) target = $region96
        $region95: #{tpu_custom_call.1} parent=87 // pred_region
          %p1419 = scmp.lt.s32.totalorder %s38, 1
          %s1420 = scalar_select %p1419, %s38, 1
          %s1421 = smul.addr %s1420, 2
          %s1422 = scalar_lea.vmem %s8, %s1421
        $region96: #{tpu_custom_call.1} parent=87 // pred_fallthru
          _
        // Predicated region
        $region97: #{tpu_custom_call.1} parent=87 // pred_check
          %p1423 = pneg %p276
        $region98: #{tpu_custom_call.1} parent=87 // pred_check_branch
          %1425 = sbr.rel (%p1423) target = $region100
        $region99: #{tpu_custom_call.1} parent=87 // pred_region
          %s1426 = sand.u32 %s261, 1
          %s1427 = scalar_lea.sflag [#allocation7], %s1426
          %s1428 = sand.u32 %s261, 1
          %s1429 = smul.addr %s1428, 2
          %s1430 = scalar_lea.vmem [#allocation11], %s1429
          %1431 = dma.done %s1427, 32
        $region100: #{tpu_custom_call.1} parent=87 // pred_fallthru
          _
        // Predicated region
        $region101: #{tpu_custom_call.1} parent=87 // pred_check
          %p1432 = pneg %p306
        $region102: #{tpu_custom_call.1} parent=87 // pred_check_branch
          %1434 = sbr.rel (%p1432) target = $region104
        $region103: #{tpu_custom_call.1} parent=87 // pred_region
          %s1435 = sand.u32 %s291, 1
          %s1436 = scalar_lea.sflag [#allocation13], %s1435
          %s1437 = sand.u32 %s291, 1
          %s1438 = smul.addr %s1437, 2
          %s1439 = scalar_lea.vmem [#allocation12], %s1438
          %1440 = dma.done %s1436, 32
        $region104: #{tpu_custom_call.1} parent=87 // pred_fallthru
          _
      $region88: #{tpu_custom_call.1} parent=5 // pred_fallthru
        _
    $region6: #{tpu_custom_call.1} parent=1 // loop_footer
      %s31 = sadd.s32 1, %s27
    $region7: #{tpu_custom_call.1} parent=1 // loop_footer_branch
      %26 = sbr.rel target = $region3
    $region8: #{tpu_custom_call.1} parent=1 // loop_exit
      _
    %1441 = vsyncpa [#allocation6], 1
    %s1442 = scalar_lea.sflag [#allocation6], 1
    %1443 = vsyncpa %s1442, 1
    %1444 = vsyncpa [#allocation9], 1
    %1445 = vsyncpa [#allocation7], 1
    %s1446 = scalar_lea.sflag [#allocation7], 1
    %1447 = vsyncpa %s1446, 1
    %1448 = vsyncpa [#allocation13], 1
    %s1449 = scalar_lea.sflag [#allocation13], 1
    %1450 = vsyncpa %s1449, 1

</llo_original>
